<compile_context>
chip_gen: v7x
topology: tpu7x:2x2x1
jax: 0.10.0
libtpu: 0.0.40
codegen_flags: <defaults>
</compile_context>

<pallas_src>
import functools

import jax
import jax.numpy as jnp
import numpy as np
from jax import lax
from jax.experimental import pallas as pl
from jax.experimental.pallas import tpu as pltpu


# ----------------------------- in-kernel helpers ---------------------------

def _gn_silu(x, gm, gamma, beta, eps):
    """GroupNorm + SiLU on a channels-major (C, HW) tile.

    gm is a (C, C) group-averaging matrix: gm[c, c'] = 1/(cg*HW) if c, c' are in
    the same group, else 0 (so gm @ per_channel_sum = per-channel group mean).
    """
    s = jnp.sum(x, axis=1, keepdims=True)                                # (C, 1)
    mean = jnp.dot(gm, s, preferred_element_type=jnp.float32)            # (C, 1)
    d = x - mean
    var = jnp.dot(gm, jnp.sum(d * d, axis=1, keepdims=True),
                  preferred_element_type=jnp.float32)                    # centered (two-pass) var
    y = d * (lax.rsqrt(var + eps) * gamma) + beta
    return y * jax.nn.sigmoid(y)                                         # SiLU


def _conv3x3(y, w2d, H, W):
    """3x3 'SAME' conv on a channels-major (C, HW) tile as ONE im2col matmul.

    w2d: (Cout, 9*C) with column index = (kh*3 + kw)*C + c  (kh = dh+1, kw = dw+1).
    Returns (Cout, HW).
    """
    HW = H * W
    P = W + 1
    yp = jnp.pad(y, ((0, 0), (P, P)))                      # zero halo in flattened HW axis
    col = lax.broadcasted_iota(jnp.int32, (1, HW), 1) % W  # j coordinate per flattened pixel
    left_ok = (col > 0).astype(jnp.float32)                # valid source for dw == -1
    right_ok = (col < W - 1).astype(jnp.float32)           # valid source for dw == +1
    taps = []
    for dh in (-1, 0, 1):
        for dw in (-1, 0, 1):
            start = P + dh * W + dw
            t = yp[:, start:start + HW]                    # shifted tap (row over/underflow -> pad zeros)
            if dw == -1:
                t = t * left_ok                            # kill column wrap-around
            elif dw == 1:
                t = t * right_ok
            taps.append(t)
    patches = jnp.concatenate(taps, axis=0)                # (9*C, HW) im2col, K on sublanes
    return jnp.dot(w2d, patches, preferred_element_type=jnp.float32)


# ----------------------------- fused kernel --------------------------------

def residual_block_kernel(x_ref, gm1_ref, gamma1_ref, beta1_ref, w1_ref, b1_ref,
                          extra_ref, gm2_ref, gamma2_ref, beta2_ref, w2_ref, b2_ref,
                          *rest, H, W, eps, conv_shortcut):
    """Whole ResidualBlock forward for one batch element (block = (1, C, H*W))."""
    if conv_shortcut:
        scw_ref, scb_ref, o_ref = rest
    else:
        (o_ref,) = rest

    x = x_ref[0].astype(jnp.float32)                                      # (Cin, HW)

    # block1: GroupNorm + SiLU -> 3x3 conv + bias + (time + class) embedding bias
    y1 = _gn_silu(x, gm1_ref[...], gamma1_ref[...], beta1_ref[...], eps)
    h = _conv3x3(y1, w1_ref[...], H, W) + b1_ref[...] + extra_ref[0]      # (Cout, HW)

    # block2: GroupNorm + SiLU -> 3x3 conv + bias
    y2 = _gn_silu(h, gm2_ref[...], gamma2_ref[...], beta2_ref[...], eps)
    out = _conv3x3(y2, w2_ref[...], H, W) + b2_ref[...]                   # (Cout, HW)

    # shortcut (fused 1x1 conv or identity)
    if conv_shortcut:
        out = out + jnp.dot(scw_ref[...], x,
                            preferred_element_type=jnp.float32) + scb_ref[...]
    else:
        out = out + x

    o_ref[0] = out.astype(o_ref.dtype)


# ----------------------------- wrapper --------------------------------------

def _group_mat(C, groups, hw):
    cg = C // groups
    gidx = np.arange(C) // cg
    m = (gidx[:, None] == gidx[None, :]).astype(np.float32) / float(hw * cg)
    return jnp.asarray(m)


def residual_block_forward(x_nchw, time_emb, class_idx, p, groups=8, eps=1e-5):
    """Pallas implementation of ResidualBlock.forward (NCHW in / NCHW out)."""
    B, Cin, H, W = x_nchw.shape
    HW = H * W
    Cout = p["conv1_w"].shape[0]                          # PyTorch layout (Cout, Cin, 3, 3)

    # channels-major, lane-dense layout: (B, C, H*W) -- a free reshape of NCHW
    x = x_nchw.reshape(B, Cin, HW).astype(jnp.float32)

    # tiny conditioning glue in plain JAX: time MLP + class-embedding gather
    temb = time_emb @ p["time_w"] + p["time_b"]           # (B, Cout)
    cemb = p["class_emb"][class_idx]                      # (B, Cout)
    extra = (temb + cemb).reshape(B, Cout, 1).astype(jnp.float32)

    # weights in im2col layout: (Cout, 9*C), column = (kh*3 + kw)*C + c
    w1 = p["conv1_w"].transpose(0, 2, 3, 1).reshape(Cout, 9 * Cin).astype(jnp.float32)
    w2 = p["conv2_w"].transpose(0, 2, 3, 1).reshape(Cout, 9 * Cout).astype(jnp.float32)
    b1 = p["conv1_b"].reshape(Cout, 1).astype(jnp.float32)
    b2 = p["conv2_b"].reshape(Cout, 1).astype(jnp.float32)
    gm1 = _group_mat(Cin, groups, HW)
    gm2 = _group_mat(Cout, groups, HW)
    gamma1 = p["gn1_gamma"].reshape(Cin, 1).astype(jnp.float32)
    beta1 = p["gn1_beta"].reshape(Cin, 1).astype(jnp.float32)
    gamma2 = p["gn2_gamma"].reshape(Cout, 1).astype(jnp.float32)
    beta2 = p["gn2_beta"].reshape(Cout, 1).astype(jnp.float32)

    conv_shortcut = (Cin != Cout)

    args = [x, gm1, gamma1, beta1, w1, b1, extra, gm2, gamma2, beta2, w2, b2]
    in_specs = [
        pl.BlockSpec((1, Cin, HW), lambda b: (b, 0, 0)),
        pl.BlockSpec((Cin, Cin), lambda b: (0, 0)),
        pl.BlockSpec((Cin, 1), lambda b: (0, 0)),
        pl.BlockSpec((Cin, 1), lambda b: (0, 0)),
        pl.BlockSpec((Cout, 9 * Cin), lambda b: (0, 0)),
        pl.BlockSpec((Cout, 1), lambda b: (0, 0)),
        pl.BlockSpec((1, Cout, 1), lambda b: (b, 0, 0)),
        pl.BlockSpec((Cout, Cout), lambda b: (0, 0)),
        pl.BlockSpec((Cout, 1), lambda b: (0, 0)),
        pl.BlockSpec((Cout, 1), lambda b: (0, 0)),
        pl.BlockSpec((Cout, 9 * Cout), lambda b: (0, 0)),
        pl.BlockSpec((Cout, 1), lambda b: (0, 0)),
    ]
    if conv_shortcut:
        args += [p["sc_w"].reshape(Cout, Cin).astype(jnp.float32),
                 p["sc_b"].reshape(Cout, 1).astype(jnp.float32)]
        in_specs += [pl.BlockSpec((Cout, Cin), lambda b: (0, 0)),
                     pl.BlockSpec((Cout, 1), lambda b: (0, 0))]

    kern = functools.partial(residual_block_kernel, H=H, W=W, eps=eps,
                             conv_shortcut=conv_shortcut)
    out = pl.pallas_call(
        kern,
        out_shape=jax.ShapeDtypeStruct((B, Cout, HW), jnp.float32),
        grid=(B,),
        in_specs=in_specs,
        out_specs=pl.BlockSpec((1, Cout, HW), lambda b: (b, 0, 0)),
        compiler_params=pltpu.CompilerParams(
            dimension_semantics=("parallel",)),      # v7x: shard batch over the 2 TCs
    )(*args)

    return out.reshape(B, Cout, H, W)                 # already NCHW


# ----------------------------- pure-JAX reference ---------------------------

def reference_forward(x, time_emb, class_idx, p, groups=8, eps=1e-5):
    def gn(x, gamma, beta):
        B, C, H, W = x.shape
        xg = x.reshape(B, groups, C // groups, H, W)
        mean = xg.mean(axis=(2, 3, 4), keepdims=True)
        var = ((xg - mean) ** 2).mean(axis=(2, 3, 4), keepdims=True)
        y = ((xg - mean) / jnp.sqrt(var + eps)).reshape(B, C, H, W)
        return y * gamma[None, :, None, None] + beta[None, :, None, None]

    def silu(v):
        return v * jax.nn.sigmoid(v)

    def conv(v, w, b):
        y = lax.conv_general_dilated(v, w, (1, 1), "SAME",
                                     dimension_numbers=("NCHW", "OIHW", "NCHW"))
        return y + b[None, :, None, None]

    Cin, Cout = x.shape[1], p["conv1_w"].shape[0]
    h = conv(silu(gn(x, p["gn1_gamma"], p["gn1_beta"])), p["conv1_w"], p["conv1_b"])
    temb = time_emb @ p["time_w"] + p["time_b"]
    cemb = p["class_emb"][class_idx]
    h = h + (temb + cemb)[:, :, None, None]
    h = conv(silu(gn(h, p["gn2_gamma"], p["gn2_beta"])), p["conv2_w"], p["conv2_b"])
    res = conv(x, p["sc_w"], p["sc_b"]) if Cin != Cout else x
    return h + res


# ----------------------------- main -----------------------------------------

if __name__ == "__main__":
    B, Cin, Cout, H, W = 2, 8, 16, 16, 16
    TDIM, NCLS = 32, 2

    key = jax.random.PRNGKey(0)
    ks = jax.random.split(key, 16)
    params = {
        "gn1_gamma": 1.0 + 0.1 * jax.random.normal(ks[0], (Cin,), jnp.float32),
        "gn1_beta": 0.1 * jax.random.normal(ks[1], (Cin,), jnp.float32),
        "conv1_w": 0.1 * jax.random.normal(ks[2], (Cout, Cin, 3, 3), jnp.float32),
        "conv1_b": 0.05 * jax.random.normal(ks[3], (Cout,), jnp.float32),
        "time_w": 0.1 * jax.random.normal(ks[4], (TDIM, Cout), jnp.float32),
        "time_b": 0.05 * jax.random.normal(ks[5], (Cout,), jnp.float32),
        "class_emb": 0.1 * jax.random.normal(ks[6], (NCLS, Cout), jnp.float32),
        "gn2_gamma": 1.0 + 0.1 * jax.random.normal(ks[7], (Cout,), jnp.float32),
        "gn2_beta": 0.1 * jax.random.normal(ks[8], (Cout,), jnp.float32),
        "conv2_w": 0.1 * jax.random.normal(ks[9], (Cout, Cout, 3, 3), jnp.float32),
        "conv2_b": 0.05 * jax.random.normal(ks[10], (Cout,), jnp.float32),
        "sc_w": 0.1 * jax.random.normal(ks[11], (Cout, Cin, 1, 1), jnp.float32),
        "sc_b": 0.05 * jax.random.normal(ks[12], (Cout,), jnp.float32),
    }

    x = jax.random.normal(ks[13], (B, Cin, H, W), jnp.float32)      # NCHW, like PyTorch
    time_emb = jax.random.normal(ks[14], (B, TDIM), jnp.float32)
    class_idx = jnp.array([0, 1], jnp.int32)

    out = residual_block_forward(x, time_emb, class_idx, params)
    out = jax.block_until_ready(out)
    assert out.shape == (B, Cout, H, W)

    ref = reference_forward(x, time_emb, class_idx, params)
    np.testing.assert_allclose(np.asarray(out), np.asarray(ref), atol=2e-3, rtol=2e-3)

    print("KERNEL_OK")
</pallas_src>

<mosaic_0001>
module attributes {stable_mosaic.version = 11 : i64} {
  func.func @residual_block_kernel(%arg0: i32, %arg1: memref<1x8x256xf32, #tpu.memory_space<vmem>>, %arg2: memref<8x8xf32, #tpu.memory_space<vmem>>, %arg3: memref<8x1xf32, #tpu.memory_space<vmem>>, %arg4: memref<8x1xf32, #tpu.memory_space<vmem>>, %arg5: memref<16x72xf32, #tpu.memory_space<vmem>>, %arg6: memref<16x1xf32, #tpu.memory_space<vmem>>, %arg7: memref<1x16x1xf32, #tpu.memory_space<vmem>>, %arg8: memref<16x16xf32, #tpu.memory_space<vmem>>, %arg9: memref<16x1xf32, #tpu.memory_space<vmem>>, %arg10: memref<16x1xf32, #tpu.memory_space<vmem>>, %arg11: memref<16x144xf32, #tpu.memory_space<vmem>>, %arg12: memref<16x1xf32, #tpu.memory_space<vmem>>, %arg13: memref<16x8xf32, #tpu.memory_space<vmem>>, %arg14: memref<16x1xf32, #tpu.memory_space<vmem>>, %arg15: memref<1x16x256xf32, #tpu.memory_space<vmem>>) attributes {dimension_semantics = [#tpu.dimension_semantics<parallel>], iteration_bounds = array<i64: 2>, scalar_prefetch = 0 : i64, scratch_operands = 0 : i64, tpu.core_type = #tpu.core_type<tc>, window_params = [{transform_indices = @transform_0, window_bounds = array<i64: 1, 8, 256>}, {pipeline_mode = #tpu.pipeline_mode<synchronous>, transform_indices = @transform_1, window_bounds = array<i64: 8, 8>}, {pipeline_mode = #tpu.pipeline_mode<synchronous>, transform_indices = @transform_2, window_bounds = array<i64: 8, 1>}, {pipeline_mode = #tpu.pipeline_mode<synchronous>, transform_indices = @transform_3, window_bounds = array<i64: 8, 1>}, {pipeline_mode = #tpu.pipeline_mode<synchronous>, transform_indices = @transform_4, window_bounds = array<i64: 16, 72>}, {pipeline_mode = #tpu.pipeline_mode<synchronous>, transform_indices = @transform_5, window_bounds = array<i64: 16, 1>}, {transform_indices = @transform_6, window_bounds = array<i64: 1, 16, 1>}, {pipeline_mode = #tpu.pipeline_mode<synchronous>, transform_indices = @transform_7, window_bounds = array<i64: 16, 16>}, {pipeline_mode = #tpu.pipeline_mode<synchronous>, transform_indices = @transform_8, window_bounds = array<i64: 16, 1>}, {pipeline_mode = #tpu.pipeline_mode<synchronous>, transform_indices = @transform_9, window_bounds = array<i64: 16, 1>}, {pipeline_mode = #tpu.pipeline_mode<synchronous>, transform_indices = @transform_10, window_bounds = array<i64: 16, 144>}, {pipeline_mode = #tpu.pipeline_mode<synchronous>, transform_indices = @transform_11, window_bounds = array<i64: 16, 1>}, {pipeline_mode = #tpu.pipeline_mode<synchronous>, transform_indices = @transform_12, window_bounds = array<i64: 16, 8>}, {pipeline_mode = #tpu.pipeline_mode<synchronous>, transform_indices = @transform_13, window_bounds = array<i64: 16, 1>}, {transform_indices = @transform_14, window_bounds = array<i64: 1, 16, 256>}]} {
    %c0 = arith.constant 0 : index
    %c0_0 = arith.constant 0 : index
    %c0_1 = arith.constant 0 : index
    %0 = vector.load %arg1[%c0, %c0_0, %c0_1] : memref<1x8x256xf32, #tpu.memory_space<vmem>>, vector<1x8x256xf32>
    %1 = vector.shape_cast %0 : vector<1x8x256xf32> to vector<8x256xf32>
    %c0_2 = arith.constant 0 : index
    %c0_3 = arith.constant 0 : index
    %2 = vector.load %arg2[%c0_2, %c0_3] : memref<8x8xf32, #tpu.memory_space<vmem>>, vector<8x8xf32>
    %c0_4 = arith.constant 0 : index
    %c0_5 = arith.constant 0 : index
    %3 = vector.load %arg3[%c0_4, %c0_5] : memref<8x1xf32, #tpu.memory_space<vmem>>, vector<8x1xf32>
    %c0_6 = arith.constant 0 : index
    %c0_7 = arith.constant 0 : index
    %4 = vector.load %arg4[%c0_6, %c0_7] : memref<8x1xf32, #tpu.memory_space<vmem>>, vector<8x1xf32>
    %cst = arith.constant dense<0.000000e+00> : vector<8xf32>
    %5 = vector.multi_reduction <add>, %1, %cst [1] : vector<8x256xf32> to vector<8xf32>
    %6 = vector.shape_cast %5 : vector<8xf32> to vector<8x1xf32>
    %cst_8 = arith.constant dense<0.000000e+00> : vector<8x1xf32>
    %7 = tpu.matmul %2, %6, %cst_8 {dimension_numbers = #tpu.dot_dimension_numbers<[1], [0], [0], [1], [0, 0, 1, 1], [], []>} : vector<8x8xf32>, vector<8x1xf32>, vector<8x1xf32> -> vector<8x1xf32>
    %8 = vector.broadcast %7 : vector<8x1xf32> to vector<8x256xf32>
    %9 = arith.subf %1, %8 : vector<8x256xf32>
    %10 = arith.mulf %9, %9 : vector<8x256xf32>
    %cst_9 = arith.constant dense<0.000000e+00> : vector<8xf32>
    %11 = vector.multi_reduction <add>, %10, %cst_9 [1] : vector<8x256xf32> to vector<8xf32>
    %12 = vector.shape_cast %11 : vector<8xf32> to vector<8x1xf32>
    %cst_10 = arith.constant dense<0.000000e+00> : vector<8x1xf32>
    %13 = tpu.matmul %2, %12, %cst_10 {dimension_numbers = #tpu.dot_dimension_numbers<[1], [0], [0], [1], [0, 0, 1, 1], [], []>} : vector<8x8xf32>, vector<8x1xf32>, vector<8x1xf32> -> vector<8x1xf32>
    %cst_11 = arith.constant 9.99999974E-6 : f32
    %14 = vector.broadcast %cst_11 : f32 to vector<8x1xf32>
    %15 = arith.addf %13, %14 : vector<8x1xf32>
    %16 = math.rsqrt %15 : vector<8x1xf32>
    %17 = arith.mulf %16, %3 : vector<8x1xf32>
    %18 = vector.broadcast %17 : vector<8x1xf32> to vector<8x256xf32>
    %19 = arith.mulf %9, %18 : vector<8x256xf32>
    %20 = vector.broadcast %4 : vector<8x1xf32> to vector<8x256xf32>
    %21 = arith.addf %19, %20 : vector<8x256xf32>
    %22 = arith.negf %21 : vector<8x256xf32>
    %23 = math.exp %22 : vector<8x256xf32>
    %cst_12 = arith.constant 1.000000e+00 : f32
    %24 = vector.broadcast %cst_12 : f32 to vector<8x256xf32>
    %25 = arith.addf %24, %23 : vector<8x256xf32>
    %26 = arith.divf %24, %25 : vector<8x256xf32>
    %27 = arith.mulf %21, %26 : vector<8x256xf32>
    %c0_13 = arith.constant 0 : index
    %c0_14 = arith.constant 0 : index
    %28 = vector.load %arg5[%c0_13, %c0_14] : memref<16x72xf32, #tpu.memory_space<vmem>>, vector<16x72xf32>
    %c0_i32 = arith.constant 0 : i32
    %29 = arith.sitofp %c0_i32 : i32 to f32
    %30 = vector.broadcast %29 : f32 to vector<8x17xf32>
    %31 = tpu.concatenate %30, %27 in 1 : vector<8x17xf32>, vector<8x256xf32> -> vector<8x273xf32>
    %32 = vector.broadcast %29 : f32 to vector<8x17xf32>
    %33 = tpu.concatenate %31, %32 in 1 : vector<8x273xf32>, vector<8x17xf32> -> vector<8x290xf32>
    %34 = tpu.iota {dimensions = array<i32: 1>} : vector<1x256xi32>
    %c16_i32 = arith.constant 16 : i32
    %c0_i32_15 = arith.constant 0 : i32
    %35 = arith.cmpi eq, %c16_i32, %c0_i32_15 : i32
    %c1_i32 = arith.constant 1 : i32
    %36 = arith.select %35, %c1_i32, %c16_i32 : i32
    %37 = vector.broadcast %36 : i32 to vector<1x256xi32>
    %38 = arith.remsi %34, %37 : vector<1x256xi32>
    %c0_i32_16 = arith.constant 0 : i32
    %39 = vector.broadcast %c0_i32_16 : i32 to vector<1x256xi32>
    %40 = arith.cmpi ne, %38, %39 : vector<1x256xi32>
    %c0_i32_17 = arith.constant 0 : i32
    %41 = vector.broadcast %c0_i32_17 : i32 to vector<1x256xi32>
    %42 = arith.cmpi slt, %38, %41 : vector<1x256xi32>
    %c0_i32_18 = arith.constant 0 : i32
    %43 = arith.cmpi slt, %36, %c0_i32_18 : i32
    %44 = vector.broadcast %43 : i1 to vector<1x256xi1>
    %45 = vector.broadcast %44 : vector<1x256xi1> to vector<1x256xi1>
    %46 = arith.xori %42, %45 : vector<1x256xi1>
    %47 = arith.andi %46, %40 : vector<1x256xi1>
    %48 = vector.broadcast %36 : i32 to vector<1x256xi32>
    %49 = arith.addi %38, %48 : vector<1x256xi32>
    %50 = arith.select %47, %49, %38 : vector<1x256xi1>, vector<1x256xi32>
    %c0_i32_19 = arith.constant 0 : i32
    %51 = vector.broadcast %c0_i32_19 : i32 to vector<1x256xi32>
    %52 = arith.cmpi sgt, %50, %51 : vector<1x256xi32>
    %53 = arith.extui %52 : vector<1x256xi1> to vector<1x256xi32>
    %54 = arith.sitofp %53 : vector<1x256xi32> to vector<1x256xf32>
    %c15_i32 = arith.constant 15 : i32
    %55 = vector.broadcast %c15_i32 : i32 to vector<1x256xi32>
    %56 = arith.cmpi slt, %50, %55 : vector<1x256xi32>
    %57 = arith.extui %56 : vector<1x256xi1> to vector<1x256xi32>
    %58 = arith.sitofp %57 : vector<1x256xi32> to vector<1x256xf32>
    %59 = vector.extract_strided_slice %33 {offsets = [0, 0], sizes = [8, 256], strides = [1, 1]} : vector<8x290xf32> to vector<8x256xf32>
    %60 = vector.broadcast %54 : vector<1x256xf32> to vector<8x256xf32>
    %61 = arith.mulf %59, %60 : vector<8x256xf32>
    %62 = vector.extract_strided_slice %33 {offsets = [0, 1], sizes = [8, 256], strides = [1, 1]} : vector<8x290xf32> to vector<8x256xf32>
    %63 = vector.extract_strided_slice %33 {offsets = [0, 2], sizes = [8, 256], strides = [1, 1]} : vector<8x290xf32> to vector<8x256xf32>
    %64 = vector.broadcast %58 : vector<1x256xf32> to vector<8x256xf32>
    %65 = arith.mulf %63, %64 : vector<8x256xf32>
    %66 = vector.extract_strided_slice %33 {offsets = [0, 16], sizes = [8, 256], strides = [1, 1]} : vector<8x290xf32> to vector<8x256xf32>
    %67 = vector.broadcast %54 : vector<1x256xf32> to vector<8x256xf32>
    %68 = arith.mulf %66, %67 : vector<8x256xf32>
    %69 = vector.extract_strided_slice %33 {offsets = [0, 17], sizes = [8, 256], strides = [1, 1]} : vector<8x290xf32> to vector<8x256xf32>
    %70 = vector.extract_strided_slice %33 {offsets = [0, 18], sizes = [8, 256], strides = [1, 1]} : vector<8x290xf32> to vector<8x256xf32>
    %71 = vector.broadcast %58 : vector<1x256xf32> to vector<8x256xf32>
    %72 = arith.mulf %70, %71 : vector<8x256xf32>
    %73 = vector.extract_strided_slice %33 {offsets = [0, 32], sizes = [8, 256], strides = [1, 1]} : vector<8x290xf32> to vector<8x256xf32>
    %74 = vector.broadcast %54 : vector<1x256xf32> to vector<8x256xf32>
    %75 = arith.mulf %73, %74 : vector<8x256xf32>
    %76 = vector.extract_strided_slice %33 {offsets = [0, 33], sizes = [8, 256], strides = [1, 1]} : vector<8x290xf32> to vector<8x256xf32>
    %77 = vector.extract_strided_slice %33 {offsets = [0, 34], sizes = [8, 256], strides = [1, 1]} : vector<8x290xf32> to vector<8x256xf32>
    %78 = vector.broadcast %58 : vector<1x256xf32> to vector<8x256xf32>
    %79 = arith.mulf %77, %78 : vector<8x256xf32>
    %80 = tpu.concatenate %61, %62, %65, %68, %69, %72, %75, %76, %79 in 0 : vector<8x256xf32>, vector<8x256xf32>, vector<8x256xf32>, vector<8x256xf32>, vector<8x256xf32>, vector<8x256xf32>, vector<8x256xf32>, vector<8x256xf32>, vector<8x256xf32> -> vector<72x256xf32>
    %cst_20 = arith.constant dense<0.000000e+00> : vector<16x256xf32>
    %81 = tpu.matmul %28, %80, %cst_20 {dimension_numbers = #tpu.dot_dimension_numbers<[1], [0], [0], [1], [0, 0, 1, 1], [], []>} : vector<16x72xf32>, vector<72x256xf32>, vector<16x256xf32> -> vector<16x256xf32>
    %c0_21 = arith.constant 0 : index
    %c0_22 = arith.constant 0 : index
    %82 = vector.load %arg6[%c0_21, %c0_22] : memref<16x1xf32, #tpu.memory_space<vmem>>, vector<16x1xf32>
    %83 = vector.broadcast %82 : vector<16x1xf32> to vector<16x256xf32>
    %84 = arith.addf %81, %83 : vector<16x256xf32>
    %c0_23 = arith.constant 0 : index
    %c0_24 = arith.constant 0 : index
    %c0_25 = arith.constant 0 : index
    %85 = vector.load %arg7[%c0_23, %c0_24, %c0_25] : memref<1x16x1xf32, #tpu.memory_space<vmem>>, vector<1x16x1xf32>
    %86 = vector.shape_cast %85 : vector<1x16x1xf32> to vector<16x1xf32>
    %87 = vector.broadcast %86 : vector<16x1xf32> to vector<16x256xf32>
    %88 = arith.addf %84, %87 : vector<16x256xf32>
    %c0_26 = arith.constant 0 : index
    %c0_27 = arith.constant 0 : index
    %89 = vector.load %arg8[%c0_26, %c0_27] : memref<16x16xf32, #tpu.memory_space<vmem>>, vector<16x16xf32>
    %c0_28 = arith.constant 0 : index
    %c0_29 = arith.constant 0 : index
    %90 = vector.load %arg9[%c0_28, %c0_29] : memref<16x1xf32, #tpu.memory_space<vmem>>, vector<16x1xf32>
    %c0_30 = arith.constant 0 : index
    %c0_31 = arith.constant 0 : index
    %91 = vector.load %arg10[%c0_30, %c0_31] : memref<16x1xf32, #tpu.memory_space<vmem>>, vector<16x1xf32>
    %cst_32 = arith.constant dense<0.000000e+00> : vector<16xf32>
    %92 = vector.multi_reduction <add>, %88, %cst_32 [1] : vector<16x256xf32> to vector<16xf32>
    %93 = vector.shape_cast %92 : vector<16xf32> to vector<16x1xf32>
    %cst_33 = arith.constant dense<0.000000e+00> : vector<16x1xf32>
    %94 = tpu.matmul %89, %93, %cst_33 {dimension_numbers = #tpu.dot_dimension_numbers<[1], [0], [0], [1], [0, 0, 1, 1], [], []>} : vector<16x16xf32>, vector<16x1xf32>, vector<16x1xf32> -> vector<16x1xf32>
    %95 = vector.broadcast %94 : vector<16x1xf32> to vector<16x256xf32>
    %96 = arith.subf %88, %95 : vector<16x256xf32>
    %97 = arith.mulf %96, %96 : vector<16x256xf32>
    %cst_34 = arith.constant dense<0.000000e+00> : vector<16xf32>
    %98 = vector.multi_reduction <add>, %97, %cst_34 [1] : vector<16x256xf32> to vector<16xf32>
    %99 = vector.shape_cast %98 : vector<16xf32> to vector<16x1xf32>
    %cst_35 = arith.constant dense<0.000000e+00> : vector<16x1xf32>
    %100 = tpu.matmul %89, %99, %cst_35 {dimension_numbers = #tpu.dot_dimension_numbers<[1], [0], [0], [1], [0, 0, 1, 1], [], []>} : vector<16x16xf32>, vector<16x1xf32>, vector<16x1xf32> -> vector<16x1xf32>
    %cst_36 = arith.constant 9.99999974E-6 : f32
    %101 = vector.broadcast %cst_36 : f32 to vector<16x1xf32>
    %102 = arith.addf %100, %101 : vector<16x1xf32>
    %103 = math.rsqrt %102 : vector<16x1xf32>
    %104 = arith.mulf %103, %90 : vector<16x1xf32>
    %105 = vector.broadcast %104 : vector<16x1xf32> to vector<16x256xf32>
    %106 = arith.mulf %96, %105 : vector<16x256xf32>
    %107 = vector.broadcast %91 : vector<16x1xf32> to vector<16x256xf32>
    %108 = arith.addf %106, %107 : vector<16x256xf32>
    %109 = arith.negf %108 : vector<16x256xf32>
    %110 = math.exp %109 : vector<16x256xf32>
    %cst_37 = arith.constant 1.000000e+00 : f32
    %111 = vector.broadcast %cst_37 : f32 to vector<16x256xf32>
    %112 = arith.addf %111, %110 : vector<16x256xf32>
    %113 = arith.divf %111, %112 : vector<16x256xf32>
    %114 = arith.mulf %108, %113 : vector<16x256xf32>
    %c0_38 = arith.constant 0 : index
    %c0_39 = arith.constant 0 : index
    %115 = vector.load %arg11[%c0_38, %c0_39] : memref<16x144xf32, #tpu.memory_space<vmem>>, vector<16x144xf32>
    %c0_i32_40 = arith.constant 0 : i32
    %116 = arith.sitofp %c0_i32_40 : i32 to f32
    %117 = vector.broadcast %116 : f32 to vector<16x17xf32>
    %118 = tpu.concatenate %117, %114 in 1 : vector<16x17xf32>, vector<16x256xf32> -> vector<16x273xf32>
    %119 = vector.broadcast %116 : f32 to vector<16x17xf32>
    %120 = tpu.concatenate %118, %119 in 1 : vector<16x273xf32>, vector<16x17xf32> -> vector<16x290xf32>
    %121 = tpu.iota {dimensions = array<i32: 1>} : vector<1x256xi32>
    %c16_i32_41 = arith.constant 16 : i32
    %c0_i32_42 = arith.constant 0 : i32
    %122 = arith.cmpi eq, %c16_i32_41, %c0_i32_42 : i32
    %c1_i32_43 = arith.constant 1 : i32
    %123 = arith.select %122, %c1_i32_43, %c16_i32_41 : i32
    %124 = vector.broadcast %123 : i32 to vector<1x256xi32>
    %125 = arith.remsi %121, %124 : vector<1x256xi32>
    %c0_i32_44 = arith.constant 0 : i32
    %126 = vector.broadcast %c0_i32_44 : i32 to vector<1x256xi32>
    %127 = arith.cmpi ne, %125, %126 : vector<1x256xi32>
    %c0_i32_45 = arith.constant 0 : i32
    %128 = vector.broadcast %c0_i32_45 : i32 to vector<1x256xi32>
    %129 = arith.cmpi slt, %125, %128 : vector<1x256xi32>
    %c0_i32_46 = arith.constant 0 : i32
    %130 = arith.cmpi slt, %123, %c0_i32_46 : i32
    %131 = vector.broadcast %130 : i1 to vector<1x256xi1>
    %132 = vector.broadcast %131 : vector<1x256xi1> to vector<1x256xi1>
    %133 = arith.xori %129, %132 : vector<1x256xi1>
    %134 = arith.andi %133, %127 : vector<1x256xi1>
    %135 = vector.broadcast %123 : i32 to vector<1x256xi32>
    %136 = arith.addi %125, %135 : vector<1x256xi32>
    %137 = arith.select %134, %136, %125 : vector<1x256xi1>, vector<1x256xi32>
    %c0_i32_47 = arith.constant 0 : i32
    %138 = vector.broadcast %c0_i32_47 : i32 to vector<1x256xi32>
    %139 = arith.cmpi sgt, %137, %138 : vector<1x256xi32>
    %140 = arith.extui %139 : vector<1x256xi1> to vector<1x256xi32>
    %141 = arith.sitofp %140 : vector<1x256xi32> to vector<1x256xf32>
    %c15_i32_48 = arith.constant 15 : i32
    %142 = vector.broadcast %c15_i32_48 : i32 to vector<1x256xi32>
    %143 = arith.cmpi slt, %137, %142 : vector<1x256xi32>
    %144 = arith.extui %143 : vector<1x256xi1> to vector<1x256xi32>
    %145 = arith.sitofp %144 : vector<1x256xi32> to vector<1x256xf32>
    %146 = vector.extract_strided_slice %120 {offsets = [0, 0], sizes = [16, 256], strides = [1, 1]} : vector<16x290xf32> to vector<16x256xf32>
    %147 = vector.broadcast %141 : vector<1x256xf32> to vector<16x256xf32>
    %148 = arith.mulf %146, %147 : vector<16x256xf32>
    %149 = vector.extract_strided_slice %120 {offsets = [0, 1], sizes = [16, 256], strides = [1, 1]} : vector<16x290xf32> to vector<16x256xf32>
    %150 = vector.extract_strided_slice %120 {offsets = [0, 2], sizes = [16, 256], strides = [1, 1]} : vector<16x290xf32> to vector<16x256xf32>
    %151 = vector.broadcast %145 : vector<1x256xf32> to vector<16x256xf32>
    %152 = arith.mulf %150, %151 : vector<16x256xf32>
    %153 = vector.extract_strided_slice %120 {offsets = [0, 16], sizes = [16, 256], strides = [1, 1]} : vector<16x290xf32> to vector<16x256xf32>
    %154 = vector.broadcast %141 : vector<1x256xf32> to vector<16x256xf32>
    %155 = arith.mulf %153, %154 : vector<16x256xf32>
    %156 = vector.extract_strided_slice %120 {offsets = [0, 17], sizes = [16, 256], strides = [1, 1]} : vector<16x290xf32> to vector<16x256xf32>
    %157 = vector.extract_strided_slice %120 {offsets = [0, 18], sizes = [16, 256], strides = [1, 1]} : vector<16x290xf32> to vector<16x256xf32>
    %158 = vector.broadcast %145 : vector<1x256xf32> to vector<16x256xf32>
    %159 = arith.mulf %157, %158 : vector<16x256xf32>
    %160 = vector.extract_strided_slice %120 {offsets = [0, 32], sizes = [16, 256], strides = [1, 1]} : vector<16x290xf32> to vector<16x256xf32>
    %161 = vector.broadcast %141 : vector<1x256xf32> to vector<16x256xf32>
    %162 = arith.mulf %160, %161 : vector<16x256xf32>
    %163 = vector.extract_strided_slice %120 {offsets = [0, 33], sizes = [16, 256], strides = [1, 1]} : vector<16x290xf32> to vector<16x256xf32>
    %164 = vector.extract_strided_slice %120 {offsets = [0, 34], sizes = [16, 256], strides = [1, 1]} : vector<16x290xf32> to vector<16x256xf32>
    %165 = vector.broadcast %145 : vector<1x256xf32> to vector<16x256xf32>
    %166 = arith.mulf %164, %165 : vector<16x256xf32>
    %167 = tpu.concatenate %148, %149, %152, %155, %156, %159, %162, %163, %166 in 0 : vector<16x256xf32>, vector<16x256xf32>, vector<16x256xf32>, vector<16x256xf32>, vector<16x256xf32>, vector<16x256xf32>, vector<16x256xf32>, vector<16x256xf32>, vector<16x256xf32> -> vector<144x256xf32>
    %cst_49 = arith.constant dense<0.000000e+00> : vector<16x256xf32>
    %168 = tpu.matmul %115, %167, %cst_49 {dimension_numbers = #tpu.dot_dimension_numbers<[1], [0], [0], [1], [0, 0, 1, 1], [], []>} : vector<16x144xf32>, vector<144x256xf32>, vector<16x256xf32> -> vector<16x256xf32>
    %c0_50 = arith.constant 0 : index
    %c0_51 = arith.constant 0 : index
    %169 = vector.load %arg12[%c0_50, %c0_51] : memref<16x1xf32, #tpu.memory_space<vmem>>, vector<16x1xf32>
    %170 = vector.broadcast %169 : vector<16x1xf32> to vector<16x256xf32>
    %171 = arith.addf %168, %170 : vector<16x256xf32>
    %c0_52 = arith.constant 0 : index
    %c0_53 = arith.constant 0 : index
    %172 = vector.load %arg13[%c0_52, %c0_53] : memref<16x8xf32, #tpu.memory_space<vmem>>, vector<16x8xf32>
    %cst_54 = arith.constant dense<0.000000e+00> : vector<16x256xf32>
    %173 = tpu.matmul %172, %1, %cst_54 {dimension_numbers = #tpu.dot_dimension_numbers<[1], [0], [0], [1], [0, 0, 1, 1], [], []>} : vector<16x8xf32>, vector<8x256xf32>, vector<16x256xf32> -> vector<16x256xf32>
    %174 = arith.addf %171, %173 : vector<16x256xf32>
    %c0_55 = arith.constant 0 : index
    %c0_56 = arith.constant 0 : index
    %175 = vector.load %arg14[%c0_55, %c0_56] : memref<16x1xf32, #tpu.memory_space<vmem>>, vector<16x1xf32>
    %176 = vector.broadcast %175 : vector<16x1xf32> to vector<16x256xf32>
    %177 = arith.addf %174, %176 : vector<16x256xf32>
    %c0_57 = arith.constant 0 : index
    %c0_58 = arith.constant 0 : index
    %c0_59 = arith.constant 0 : index
    %178 = vector.load %arg15[%c0_57, %c0_58, %c0_59] : memref<1x16x256xf32, #tpu.memory_space<vmem>>, vector<1x16x256xf32>
    %179 = vector.shape_cast %178 : vector<1x16x256xf32> to vector<16x256xf32>
    %180 = vector.shape_cast %177 : vector<16x256xf32> to vector<1x16x256xf32>
    tpu.vector_store %arg15[%c0_57, %c0_58, %c0_59], %180 {strides = array<i32>} : memref<1x16x256xf32, #tpu.memory_space<vmem>>, vector<1x16x256xf32>,
    return
  }
  func.func @transform_0(%arg0: i32) -> (i32, i32, i32) {
    %c0_i32 = arith.constant 0 : i32
    %c0_i32_0 = arith.constant 0 : i32
    %c0_i32_1 = arith.constant 0 : i32
    return %arg0, %c0_i32, %c0_i32_0 : i32, i32, i32
  }
  func.func @transform_1(%arg0: i32) -> (i32, i32) {
    %c0_i32 = arith.constant 0 : i32
    %c0_i32_0 = arith.constant 0 : i32
    %c0_i32_1 = arith.constant 0 : i32
    return %c0_i32, %c0_i32_0 : i32, i32
  }
  func.func @transform_2(%arg0: i32) -> (i32, i32) {
    %c0_i32 = arith.constant 0 : i32
    %c0_i32_0 = arith.constant 0 : i32
    %c0_i32_1 = arith.constant 0 : i32
    return %c0_i32, %c0_i32_0 : i32, i32
  }
  func.func @transform_3(%arg0: i32) -> (i32, i32) {
    %c0_i32 = arith.constant 0 : i32
    %c0_i32_0 = arith.constant 0 : i32
    %c0_i32_1 = arith.constant 0 : i32
    return %c0_i32, %c0_i32_0 : i32, i32
  }
  func.func @transform_4(%arg0: i32) -> (i32, i32) {
    %c0_i32 = arith.constant 0 : i32
    %c0_i32_0 = arith.constant 0 : i32
    %c0_i32_1 = arith.constant 0 : i32
    return %c0_i32, %c0_i32_0 : i32, i32
  }
  func.func @transform_5(%arg0: i32) -> (i32, i32) {
    %c0_i32 = arith.constant 0 : i32
    %c0_i32_0 = arith.constant 0 : i32
    %c0_i32_1 = arith.constant 0 : i32
    return %c0_i32, %c0_i32_0 : i32, i32
  }
  func.func @transform_6(%arg0: i32) -> (i32, i32, i32) {
    %c0_i32 = arith.constant 0 : i32
    %c0_i32_0 = arith.constant 0 : i32
    %c0_i32_1 = arith.constant 0 : i32
    return %arg0, %c0_i32, %c0_i32_0 : i32, i32, i32
  }
  func.func @transform_7(%arg0: i32) -> (i32, i32) {
    %c0_i32 = arith.constant 0 : i32
    %c0_i32_0 = arith.constant 0 : i32
    %c0_i32_1 = arith.constant 0 : i32
    return %c0_i32, %c0_i32_0 : i32, i32
  }
  func.func @transform_8(%arg0: i32) -> (i32, i32) {
    %c0_i32 = arith.constant 0 : i32
    %c0_i32_0 = arith.constant 0 : i32
    %c0_i32_1 = arith.constant 0 : i32
    return %c0_i32, %c0_i32_0 : i32, i32
  }
  func.func @transform_9(%arg0: i32) -> (i32, i32) {
    %c0_i32 = arith.constant 0 : i32
    %c0_i32_0 = arith.constant 0 : i32
    %c0_i32_1 = arith.constant 0 : i32
    return %c0_i32, %c0_i32_0 : i32, i32
  }
  func.func @transform_10(%arg0: i32) -> (i32, i32) {
    %c0_i32 = arith.constant 0 : i32
    %c0_i32_0 = arith.constant 0 : i32
    %c0_i32_1 = arith.constant 0 : i32
    return %c0_i32, %c0_i32_0 : i32, i32
  }
  func.func @transform_11(%arg0: i32) -> (i32, i32) {
    %c0_i32 = arith.constant 0 : i32
    %c0_i32_0 = arith.constant 0 : i32
    %c0_i32_1 = arith.constant 0 : i32
    return %c0_i32, %c0_i32_0 : i32, i32
  }
  func.func @transform_12(%arg0: i32) -> (i32, i32) {
    %c0_i32 = arith.constant 0 : i32
    %c0_i32_0 = arith.constant 0 : i32
    %c0_i32_1 = arith.constant 0 : i32
    return %c0_i32, %c0_i32_0 : i32, i32
  }
  func.func @transform_13(%arg0: i32) -> (i32, i32) {
    %c0_i32 = arith.constant 0 : i32
    %c0_i32_0 = arith.constant 0 : i32
    %c0_i32_1 = arith.constant 0 : i32
    return %c0_i32, %c0_i32_0 : i32, i32
  }
  func.func @transform_14(%arg0: i32) -> (i32, i32, i32) {
    %c0_i32 = arith.constant 0 : i32
    %c0_i32_0 = arith.constant 0 : i32
    %c0_i32_1 = arith.constant 0 : i32
    return %arg0, %c0_i32, %c0_i32_0 : i32, i32, i32
  }
}

</mosaic_0001>

<llo_original>
// kernel: tpu_custom_call.1
$region0: #{tpu_custom_call.1}
  #allocation0 [shape = 'u32[]', space=smem, size = 0x4, offset = 0x4, fixed_abs, tag = 'smem constant byte address 0x4 - core index']
  #allocation1 [shape = 'u32[144,128]{1,0:T(1,128)}', space=vmem, size = 0x12000, scoped, tag = 'internal scratch']
  %s0 = inlined_call_operand.vmem [shape: f32[2,8,256], index: 0, kind: input, shape index: {}]
  %s1 = inlined_call_operand.vmem [shape: f32[8,8], index: 1, kind: input, shape index: {}]
  %s2 = inlined_call_operand.vmem [shape: f32[8,1], index: 2, kind: input, shape index: {}]
  %s3 = inlined_call_operand.vmem [shape: f32[8,1], index: 3, kind: input, shape index: {}]
  %s4 = inlined_call_operand.vmem [shape: f32[16,72], index: 4, kind: input, shape index: {}]
  %s5 = inlined_call_operand.vmem [shape: f32[16,1], index: 5, kind: input, shape index: {}]
  %s6 = inlined_call_operand.vmem [shape: f32[2,16,1], index: 6, kind: input, shape index: {}]
  %s7 = inlined_call_operand.vmem [shape: f32[16,16], index: 7, kind: input, shape index: {}]
  %s8 = inlined_call_operand.vmem [shape: f32[16,1], index: 8, kind: input, shape index: {}]
  %s9 = inlined_call_operand.vmem [shape: f32[16,1], index: 9, kind: input, shape index: {}]
  %s10 = inlined_call_operand.vmem [shape: f32[16,144], index: 10, kind: input, shape index: {}]
  %s11 = inlined_call_operand.vmem [shape: f32[16,1], index: 11, kind: input, shape index: {}]
  %s12 = inlined_call_operand.vmem [shape: f32[16,8], index: 12, kind: input, shape index: {}]
  %s13 = inlined_call_operand.vmem [shape: f32[16,1], index: 13, kind: input, shape index: {}]
  %s14 = inlined_call_operand.hbm [shape: f32[2,16,256], index: 14, kind: output, shape index: {}]
  %s15 = sld [smem:[#allocation0]]
  $region89: #{tpu_custom_call.1} parent=0
    _
  %s17 = ssub.s32 1, %s15
  %s18 = scalar_select 0, %s17, %s15
  $region1: #{tpu_custom_call.1} parent=0
    #allocation2 [shape = 'u8[32768]{0}', space=vmem, size = 0x8000, scoped, tag = 'output window, operand 0']
    #allocation3 [shape = 's32[2]{0}', space=sflag, size = 0x8, scoped, tag = 'scoped memory for tpu_custom_call.1']
    %19 = vsyncpa [#allocation3], 0
    %s20 = scalar_lea.sflag [#allocation3], 1
    %21 = vsyncpa %s20, 0
    loop: start=0, step=1, limit=4
    $region2: #{tpu_custom_call.1} parent=1 // loop_pre_header
      _
    $region3: #{tpu_custom_call.1} parent=1 // loop_header
      %s23 = sphi 0, %s27
      %p24 = scmp.ge.s32.totalorder %s23, 4
      %s33 = sphi 0, %s35
      %s36 = sphi 0, %s33
      %s37 = sphi 0, %s36
      %s53 = sphi 0, %s37
      %s57 = sphi 0, %s57
      %s59 = sphi 0, %s57
      %s60 = sphi 0, %s59
      %s74 = sphi 0, %s60
      %s78 = sphi 0, %s78
      %s80 = sphi 0, %s78
      %s81 = sphi 0, %s80
      %s95 = sphi 0, %s81
      %s99 = sphi 0, %s99
      %s101 = sphi 0, %s99
      %s102 = sphi 0, %s101
      %s116 = sphi 0, %s102
      %s120 = sphi 0, %s120
      %s122 = sphi 0, %s120
      %s123 = sphi 0, %s122
      %s137 = sphi 0, %s123
      %s141 = sphi 0, %s141
      %s143 = sphi 0, %s141
      %s144 = sphi 0, %s143
      %s158 = sphi 0, %s144
      %s164 = sphi 0, %s166
      %s167 = sphi 0, %s164
      %s168 = sphi 0, %s167
      %s184 = sphi 0, %s168
      %s188 = sphi 0, %s188
      %s190 = sphi 0, %s188
      %s191 = sphi 0, %s190
      %s205 = sphi 0, %s191
      %s209 = sphi 0, %s209
      %s211 = sphi 0, %s209
      %s212 = sphi 0, %s211
      %s226 = sphi 0, %s212
      %s230 = sphi 0, %s230
      %s232 = sphi 0, %s230
      %s233 = sphi 0, %s232
      %s247 = sphi 0, %s233
      %s251 = sphi 0, %s251
      %s253 = sphi 0, %s251
      %s254 = sphi 0, %s253
      %s268 = sphi 0, %s254
      %s272 = sphi 0, %s272
      %s274 = sphi 0, %s272
      %s275 = sphi 0, %s274
      %s289 = sphi 0, %s275
      %s293 = sphi 0, %s293
      %s295 = sphi 0, %s293
      %s296 = sphi 0, %s295
      %s310 = sphi 0, %s296
      %s314 = sphi 0, %s314
      %s316 = sphi 0, %s314
      %s317 = sphi 0, %s316
      %s331 = sphi 0, %s317
      %s337 = sphi 0, %s339
      %s340 = sphi 0, %s337
      %s341 = sphi 0, %s340
      %s357 = sphi 0, %s341
    $region4: #{tpu_custom_call.1} parent=1 // loop_header_branch
      %26 = sbr.rel (%p24) target = $region8
    $region5: #{tpu_custom_call.1} parent=1 // loop_body
      %s28 = ssub.s32 %s23, 1
      %s29 = ssub.s32 %s23, 2
      %s30 = sadd.s32 %s23, 1
      %s31 = ssub.s32 %s23, %s30
      %p32 = scmp.eq.s32.totalorder %s31, 0
      %s34 = sadd.s32 %s33, 1
      %s35 = scalar_select %p32, %s33, %s34
      %p38 = pneg %p32
      %p39 = scmp.eq.s32.totalorder %s23, 1
      %p40 = por %p38, %p39
      %p41 = scmp.ne.s32.totalorder %s33, %s36
      %p42 = scmp.eq.s32.totalorder %s23, 0
      %p43 = por %p41, %p42
      %p44 = scmp.ne.s32.totalorder %s33, %s36
      %p45 = scmp.eq.s32.totalorder %s28, 1
      %p46 = por %p44, %p45
      %p47 = scmp.ne.s32.totalorder %s36, %s37
      %p48 = scmp.eq.s32.totalorder %s28, 0
      %p49 = por %p47, %p48
      %p50 = scmp.ne.s32.totalorder %s36, %s37
      %p51 = scmp.eq.s32.totalorder %s29, 1
      %p52 = por %p50, %p51
      %p54 = scmp.ne.s32.totalorder %s37, %s53
      %p55 = scmp.eq.s32.totalorder %s29, 0
      %p56 = por %p54, %p55
      %s58 = sadd.s32 %s57, 1
      %p61 = scmp.eq.s32.totalorder %s23, 1
      %p62 = scmp.ne.s32.totalorder %s57, %s59
      %p63 = scmp.eq.s32.totalorder %s23, 0
      %p64 = por %p62, %p63
      %p65 = scmp.ne.s32.totalorder %s57, %s59
      %p66 = scmp.eq.s32.totalorder %s28, 1
      %p67 = por %p65, %p66
      %p68 = scmp.ne.s32.totalorder %s59, %s60
      %p69 = scmp.eq.s32.totalorder %s28, 0
      %p70 = por %p68, %p69
      %p71 = scmp.ne.s32.totalorder %s59, %s60
      %p72 = scmp.eq.s32.totalorder %s29, 1
      %p73 = por %p71, %p72
      %p75 = scmp.ne.s32.totalorder %s60, %s74
      %p76 = scmp.eq.s32.totalorder %s29, 0
      %p77 = por %p75, %p76
      %s79 = sadd.s32 %s78, 1
      %p82 = scmp.eq.s32.totalorder %s23, 1
      %p83 = scmp.ne.s32.totalorder %s78, %s80
      %p84 = scmp.eq.s32.totalorder %s23, 0
      %p85 = por %p83, %p84
      %p86 = scmp.ne.s32.totalorder %s78, %s80
      %p87 = scmp.eq.s32.totalorder %s28, 1
      %p88 = por %p86, %p87
      %p89 = scmp.ne.s32.totalorder %s80, %s81
      %p90 = scmp.eq.s32.totalorder %s28, 0
      %p91 = por %p89, %p90
      %p92 = scmp.ne.s32.totalorder %s80, %s81
      %p93 = scmp.eq.s32.totalorder %s29, 1
      %p94 = por %p92, %p93
      %p96 = scmp.ne.s32.totalorder %s81, %s95
      %p97 = scmp.eq.s32.totalorder %s29, 0
      %p98 = por %p96, %p97
      %s100 = sadd.s32 %s99, 1
      %p103 = scmp.eq.s32.totalorder %s23, 1
      %p104 = scmp.ne.s32.totalorder %s99, %s101
      %p105 = scmp.eq.s32.totalorder %s23, 0
      %p106 = por %p104, %p105
      %p107 = scmp.ne.s32.totalorder %s99, %s101
      %p108 = scmp.eq.s32.totalorder %s28, 1
      %p109 = por %p107, %p108
      %p110 = scmp.ne.s32.totalorder %s101, %s102
      %p111 = scmp.eq.s32.totalorder %s28, 0
      %p112 = por %p110, %p111
      %p113 = scmp.ne.s32.totalorder %s101, %s102
      %p114 = scmp.eq.s32.totalorder %s29, 1
      %p115 = por %p113, %p114
      %p117 = scmp.ne.s32.totalorder %s102, %s116
      %p118 = scmp.eq.s32.totalorder %s29, 0
      %p119 = por %p117, %p118
      %s121 = sadd.s32 %s120, 1
      %p124 = scmp.eq.s32.totalorder %s23, 1
      %p125 = scmp.ne.s32.totalorder %s120, %s122
      %p126 = scmp.eq.s32.totalorder %s23, 0
      %p127 = por %p125, %p126
      %p128 = scmp.ne.s32.totalorder %s120, %s122
      %p129 = scmp.eq.s32.totalorder %s28, 1
      %p130 = por %p128, %p129
      %p131 = scmp.ne.s32.totalorder %s122, %s123
      %p132 = scmp.eq.s32.totalorder %s28, 0
      %p133 = por %p131, %p132
      %p134 = scmp.ne.s32.totalorder %s122, %s123
      %p135 = scmp.eq.s32.totalorder %s29, 1
      %p136 = por %p134, %p135
      %p138 = scmp.ne.s32.totalorder %s123, %s137
      %p139 = scmp.eq.s32.totalorder %s29, 0
      %p140 = por %p138, %p139
      %s142 = sadd.s32 %s141, 1
      %p145 = scmp.eq.s32.totalorder %s23, 1
      %p146 = scmp.ne.s32.totalorder %s141, %s143
      %p147 = scmp.eq.s32.totalorder %s23, 0
      %p148 = por %p146, %p147
      %p149 = scmp.ne.s32.totalorder %s141, %s143
      %p150 = scmp.eq.s32.totalorder %s28, 1
      %p151 = por %p149, %p150
      %p152 = scmp.ne.s32.totalorder %s143, %s144
      %p153 = scmp.eq.s32.totalorder %s28, 0
      %p154 = por %p152, %p153
      %p155 = scmp.ne.s32.totalorder %s143, %s144
      %p156 = scmp.eq.s32.totalorder %s29, 1
      %p157 = por %p155, %p156
      %p159 = scmp.ne.s32.totalorder %s144, %s158
      %p160 = scmp.eq.s32.totalorder %s29, 0
      %p161 = por %p159, %p160
      %s162 = ssub.s32 %s23, %s30
      %p163 = scmp.eq.s32.totalorder %s162, 0
      %s165 = sadd.s32 %s164, 1
      %s166 = scalar_select %p163, %s164, %s165
      %p169 = pneg %p163
      %p170 = scmp.eq.s32.totalorder %s23, 1
      %p171 = por %p169, %p170
      %p172 = scmp.ne.s32.totalorder %s164, %s167
      %p173 = scmp.eq.s32.totalorder %s23, 0
      %p174 = por %p172, %p173
      %p175 = scmp.ne.s32.totalorder %s164, %s167
      %p176 = scmp.eq.s32.totalorder %s28, 1
      %p177 = por %p175, %p176
      %p178 = scmp.ne.s32.totalorder %s167, %s168
      %p179 = scmp.eq.s32.totalorder %s28, 0
      %p180 = por %p178, %p179
      %p181 = scmp.ne.s32.totalorder %s167, %s168
      %p182 = scmp.eq.s32.totalorder %s29, 1
      %p183 = por %p181, %p182
      %p185 = scmp.ne.s32.totalorder %s168, %s184
      %p186 = scmp.eq.s32.totalorder %s29, 0
      %p187 = por %p185, %p186
      %s189 = sadd.s32 %s188, 1
      %p192 = scmp.eq.s32.totalorder %s23, 1
      %p193 = scmp.ne.s32.totalorder %s188, %s190
      %p194 = scmp.eq.s32.totalorder %s23, 0
      %p195 = por %p193, %p194
      %p196 = scmp.ne.s32.totalorder %s188, %s190
      %p197 = scmp.eq.s32.totalorder %s28, 1
      %p198 = por %p196, %p197
      %p199 = scmp.ne.s32.totalorder %s190, %s191
      %p200 = scmp.eq.s32.totalorder %s28, 0
      %p201 = por %p199, %p200
      %p202 = scmp.ne.s32.totalorder %s190, %s191
      %p203 = scmp.eq.s32.totalorder %s29, 1
      %p204 = por %p202, %p203
      %p206 = scmp.ne.s32.totalorder %s191, %s205
      %p207 = scmp.eq.s32.totalorder %s29, 0
      %p208 = por %p206, %p207
      %s210 = sadd.s32 %s209, 1
      %p213 = scmp.eq.s32.totalorder %s23, 1
      %p214 = scmp.ne.s32.totalorder %s209, %s211
      %p215 = scmp.eq.s32.totalorder %s23, 0
      %p216 = por %p214, %p215
      %p217 = scmp.ne.s32.totalorder %s209, %s211
      %p218 = scmp.eq.s32.totalorder %s28, 1
      %p219 = por %p217, %p218
      %p220 = scmp.ne.s32.totalorder %s211, %s212
      %p221 = scmp.eq.s32.totalorder %s28, 0
      %p222 = por %p220, %p221
      %p223 = scmp.ne.s32.totalorder %s211, %s212
      %p224 = scmp.eq.s32.totalorder %s29, 1
      %p225 = por %p223, %p224
      %p227 = scmp.ne.s32.totalorder %s212, %s226
      %p228 = scmp.eq.s32.totalorder %s29, 0
      %p229 = por %p227, %p228
      %s231 = sadd.s32 %s230, 1
      %p234 = scmp.eq.s32.totalorder %s23, 1
      %p235 = scmp.ne.s32.totalorder %s230, %s232
      %p236 = scmp.eq.s32.totalorder %s23, 0
      %p237 = por %p235, %p236
      %p238 = scmp.ne.s32.totalorder %s230, %s232
      %p239 = scmp.eq.s32.totalorder %s28, 1
      %p240 = por %p238, %p239
      %p241 = scmp.ne.s32.totalorder %s232, %s233
      %p242 = scmp.eq.s32.totalorder %s28, 0
      %p243 = por %p241, %p242
      %p244 = scmp.ne.s32.totalorder %s232, %s233
      %p245 = scmp.eq.s32.totalorder %s29, 1
      %p246 = por %p244, %p245
      %p248 = scmp.ne.s32.totalorder %s233, %s247
      %p249 = scmp.eq.s32.totalorder %s29, 0
      %p250 = por %p248, %p249
      %s252 = sadd.s32 %s251, 1
      %p255 = scmp.eq.s32.totalorder %s23, 1
      %p256 = scmp.ne.s32.totalorder %s251, %s253
      %p257 = scmp.eq.s32.totalorder %s23, 0
      %p258 = por %p256, %p257
      %p259 = scmp.ne.s32.totalorder %s251, %s253
      %p260 = scmp.eq.s32.totalorder %s28, 1
      %p261 = por %p259, %p260
      %p262 = scmp.ne.s32.totalorder %s253, %s254
      %p263 = scmp.eq.s32.totalorder %s28, 0
      %p264 = por %p262, %p263
      %p265 = scmp.ne.s32.totalorder %s253, %s254
      %p266 = scmp.eq.s32.totalorder %s29, 1
      %p267 = por %p265, %p266
      %p269 = scmp.ne.s32.totalorder %s254, %s268
      %p270 = scmp.eq.s32.totalorder %s29, 0
      %p271 = por %p269, %p270
      %s273 = sadd.s32 %s272, 1
      %p276 = scmp.eq.s32.totalorder %s23, 1
      %p277 = scmp.ne.s32.totalorder %s272, %s274
      %p278 = scmp.eq.s32.totalorder %s23, 0
      %p279 = por %p277, %p278
      %p280 = scmp.ne.s32.totalorder %s272, %s274
      %p281 = scmp.eq.s32.totalorder %s28, 1
      %p282 = por %p280, %p281
      %p283 = scmp.ne.s32.totalorder %s274, %s275
      %p284 = scmp.eq.s32.totalorder %s28, 0
      %p285 = por %p283, %p284
      %p286 = scmp.ne.s32.totalorder %s274, %s275
      %p287 = scmp.eq.s32.totalorder %s29, 1
      %p288 = por %p286, %p287
      %p290 = scmp.ne.s32.totalorder %s275, %s289
      %p291 = scmp.eq.s32.totalorder %s29, 0
      %p292 = por %p290, %p291
      %s294 = sadd.s32 %s293, 1
      %p297 = scmp.eq.s32.totalorder %s23, 1
      %p298 = scmp.ne.s32.totalorder %s293, %s295
      %p299 = scmp.eq.s32.totalorder %s23, 0
      %p300 = por %p298, %p299
      %p301 = scmp.ne.s32.totalorder %s293, %s295
      %p302 = scmp.eq.s32.totalorder %s28, 1
      %p303 = por %p301, %p302
      %p304 = scmp.ne.s32.totalorder %s295, %s296
      %p305 = scmp.eq.s32.totalorder %s28, 0
      %p306 = por %p304, %p305
      %p307 = scmp.ne.s32.totalorder %s295, %s296
      %p308 = scmp.eq.s32.totalorder %s29, 1
      %p309 = por %p307, %p308
      %p311 = scmp.ne.s32.totalorder %s296, %s310
      %p312 = scmp.eq.s32.totalorder %s29, 0
      %p313 = por %p311, %p312
      %s315 = sadd.s32 %s314, 1
      %p318 = scmp.eq.s32.totalorder %s23, 1
      %p319 = scmp.ne.s32.totalorder %s314, %s316
      %p320 = scmp.eq.s32.totalorder %s23, 0
      %p321 = por %p319, %p320
      %p322 = scmp.ne.s32.totalorder %s314, %s316
      %p323 = scmp.eq.s32.totalorder %s28, 1
      %p324 = por %p322, %p323
      %p325 = scmp.ne.s32.totalorder %s316, %s317
      %p326 = scmp.eq.s32.totalorder %s28, 0
      %p327 = por %p325, %p326
      %p328 = scmp.ne.s32.totalorder %s316, %s317
      %p329 = scmp.eq.s32.totalorder %s29, 1
      %p330 = por %p328, %p329
      %p332 = scmp.ne.s32.totalorder %s317, %s331
      %p333 = scmp.eq.s32.totalorder %s29, 0
      %p334 = por %p332, %p333
      %s335 = ssub.s32 %s23, %s30
      %p336 = scmp.eq.s32.totalorder %s335, 0
      %s338 = sadd.s32 %s337, 1
      %s339 = scalar_select %p336, %s337, %s338
      %p342 = pneg %p336
      %p343 = scmp.eq.s32.totalorder %s23, 1
      %p344 = por %p342, %p343
      %p345 = scmp.ne.s32.totalorder %s337, %s340
      %p346 = scmp.eq.s32.totalorder %s23, 0
      %p347 = por %p345, %p346
      %p348 = scmp.ne.s32.totalorder %s337, %s340
      %p349 = scmp.eq.s32.totalorder %s28, 1
      %p350 = por %p348, %p349
      %p351 = scmp.ne.s32.totalorder %s340, %s341
      %p352 = scmp.eq.s32.totalorder %s28, 0
      %p353 = por %p351, %p352
      %p354 = scmp.ne.s32.totalorder %s340, %s341
      %p355 = scmp.eq.s32.totalorder %s29, 1
      %p356 = por %p354, %p355
      %p358 = scmp.ne.s32.totalorder %s341, %s357
      %p359 = scmp.eq.s32.totalorder %s29, 0
      %p360 = por %p358, %p359
      %p361 = scmp.le.s32.totalorder 1, %s23
      %p362 = scmp.lt.s32.totalorder %s23, 3
      %p363 = pnand %p361, %p362
      %p364 = pneg %p363
      // Predicated region
      $region9: #{tpu_custom_call.1} parent=5 // pred_check
        _
      $region10: #{tpu_custom_call.1} parent=5 // pred_check_branch
        %366 = sbr.rel (%p363) target = $region12
      $region11: #{tpu_custom_call.1} parent=5 // pred_region
        %s367 = ssub.s32 %s23, 1
        // Predicated region
        $region13: #{tpu_custom_call.1} parent=11 // pred_check
          %p368 = pneg %p70
        $region14: #{tpu_custom_call.1} parent=11 // pred_check_branch
          %370 = sbr.rel (%p368) target = $region16
        $region15: #{tpu_custom_call.1} parent=11 // pred_region
          _
        $region16: #{tpu_custom_call.1} parent=11 // pred_fallthru
          _
        // Predicated region
        $region17: #{tpu_custom_call.1} parent=11 // pred_check
          %p371 = pneg %p91
        $region18: #{tpu_custom_call.1} parent=11 // pred_check_branch
          %373 = sbr.rel (%p371) target = $region20
        $region19: #{tpu_custom_call.1} parent=11 // pred_region
          _
        $region20: #{tpu_custom_call.1} parent=11 // pred_fallthru
          _
        // Predicated region
        $region21: #{tpu_custom_call.1} parent=11 // pred_check
          %p374 = pneg %p112
        $region22: #{tpu_custom_call.1} parent=11 // pred_check_branch
          %376 = sbr.rel (%p374) target = $region24
        $region23: #{tpu_custom_call.1} parent=11 // pred_region
          _
        $region24: #{tpu_custom_call.1} parent=11 // pred_fallthru
          _
        // Predicated region
        $region25: #{tpu_custom_call.1} parent=11 // pred_check
          %p377 = pneg %p133
        $region26: #{tpu_custom_call.1} parent=11 // pred_check_branch
          %379 = sbr.rel (%p377) target = $region28
        $region27: #{tpu_custom_call.1} parent=11 // pred_region
          _
        $region28: #{tpu_custom_call.1} parent=11 // pred_fallthru
          _
        // Predicated region
        $region29: #{tpu_custom_call.1} parent=11 // pred_check
          %p380 = pneg %p154
        $region30: #{tpu_custom_call.1} parent=11 // pred_check_branch
          %382 = sbr.rel (%p380) target = $region32
        $region31: #{tpu_custom_call.1} parent=11 // pred_region
          _
        $region32: #{tpu_custom_call.1} parent=11 // pred_fallthru
          _
        // Predicated region
        $region33: #{tpu_custom_call.1} parent=11 // pred_check
          %p383 = pneg %p201
        $region34: #{tpu_custom_call.1} parent=11 // pred_check_branch
          %385 = sbr.rel (%p383) target = $region36
        $region35: #{tpu_custom_call.1} parent=11 // pred_region
          _
        $region36: #{tpu_custom_call.1} parent=11 // pred_fallthru
          _
        // Predicated region
        $region37: #{tpu_custom_call.1} parent=11 // pred_check
          %p386 = pneg %p222
        $region38: #{tpu_custom_call.1} parent=11 // pred_check_branch
          %388 = sbr.rel (%p386) target = $region40
        $region39: #{tpu_custom_call.1} parent=11 // pred_region
          _
        $region40: #{tpu_custom_call.1} parent=11 // pred_fallthru
          _
        // Predicated region
        $region41: #{tpu_custom_call.1} parent=11 // pred_check
          %p389 = pneg %p243
        $region42: #{tpu_custom_call.1} parent=11 // pred_check_branch
          %391 = sbr.rel (%p389) target = $region44
        $region43: #{tpu_custom_call.1} parent=11 // pred_region
          _
        $region44: #{tpu_custom_call.1} parent=11 // pred_fallthru
          _
        // Predicated region
        $region45: #{tpu_custom_call.1} parent=11 // pred_check
          %p392 = pneg %p264
        $region46: #{tpu_custom_call.1} parent=11 // pred_check_branch
          %394 = sbr.rel (%p392) target = $region48
        $region47: #{tpu_custom_call.1} parent=11 // pred_region
          _
        $region48: #{tpu_custom_call.1} parent=11 // pred_fallthru
          _
        // Predicated region
        $region49: #{tpu_custom_call.1} parent=11 // pred_check
          %p395 = pneg %p285
        $region50: #{tpu_custom_call.1} parent=11 // pred_check_branch
          %397 = sbr.rel (%p395) target = $region52
        $region51: #{tpu_custom_call.1} parent=11 // pred_region
          _
        $region52: #{tpu_custom_call.1} parent=11 // pred_fallthru
          _
        // Predicated region
        $region53: #{tpu_custom_call.1} parent=11 // pred_check
          %p398 = pneg %p306
        $region54: #{tpu_custom_call.1} parent=11 // pred_check_branch
          %400 = sbr.rel (%p398) target = $region56
        $region55: #{tpu_custom_call.1} parent=11 // pred_region
          _
        $region56: #{tpu_custom_call.1} parent=11 // pred_fallthru
          _
        // Predicated region
        $region57: #{tpu_custom_call.1} parent=11 // pred_check
          %p401 = pneg %p327
        $region58: #{tpu_custom_call.1} parent=11 // pred_check_branch
          %403 = sbr.rel (%p401) target = $region60
        $region59: #{tpu_custom_call.1} parent=11 // pred_region
          _
        $region60: #{tpu_custom_call.1} parent=11 // pred_fallthru
          _
      $region12: #{tpu_custom_call.1} parent=5 // pred_fallthru
        _
      %p404 = scmp.lt.s32.totalorder %s23, 2
      // Predicated region
      $region61: #{tpu_custom_call.1} parent=5 // pred_check
        %p405 = pneg %p404
      $region62: #{tpu_custom_call.1} parent=5 // pred_check_branch
        %407 = sbr.rel (%p405) target = $region64
      $region63: #{tpu_custom_call.1} parent=5 // pred_region
        // Predicated region
        $region65: #{tpu_custom_call.1} parent=63 // pred_check
          %p408 = pneg %p43
        $region66: #{tpu_custom_call.1} parent=63 // pred_check_branch
          %410 = sbr.rel (%p408) target = $region68
        $region67: #{tpu_custom_call.1} parent=63 // pred_region
          %p411 = scmp.lt.s32.totalorder %s23, 1
          %s412 = scalar_select %p411, %s23, 1
          %s413 = smul.addr %s412, 2
          %s414 = smul.addr %s413, 8
          %s415 = scalar_lea.vmem %s0, %s414
        $region68: #{tpu_custom_call.1} parent=63 // pred_fallthru
          _
        // Predicated region
        $region69: #{tpu_custom_call.1} parent=63 // pred_check
          %p416 = pneg %p174
        $region70: #{tpu_custom_call.1} parent=63 // pred_check_branch
          %418 = sbr.rel (%p416) target = $region72
        $region71: #{tpu_custom_call.1} parent=63 // pred_region
          %p419 = scmp.lt.s32.totalorder %s23, 1
          %s420 = scalar_select %p419, %s23, 1
          %s421 = smul.addr %s420, 2
          %s422 = smul.addr %s421, 8
          %s423 = scalar_lea.vmem %s6, %s422
        $region72: #{tpu_custom_call.1} parent=63 // pred_fallthru
          _
      $region64: #{tpu_custom_call.1} parent=5 // pred_fallthru
        _
      %p424 = scmp.le.s32.totalorder 1, %s23
      %p425 = scmp.lt.s32.totalorder %s23, 3
      %p426 = pnand %p424, %p425
      %p427 = pneg %p426
      // Predicated region
      $region73: #{tpu_custom_call.1} parent=5 // pred_check
        _
      $region74: #{tpu_custom_call.1} parent=5 // pred_check_branch
        %429 = sbr.rel (%p426) target = $region76
      $region75: #{tpu_custom_call.1} parent=5 // pred_region
        %s430 = ssub.s32 %s23, 1
        %p431 = scmp.lt.s32.totalorder %s28, 1
        %s432 = scalar_select %p431, %s28, 1
        %s433 = smul.addr %s432, 2
        %s434 = smul.addr %s433, 8
        %s435 = scalar_lea.vmem %s0, %s434
        %p436 = pneg %p49
        %p437 = pneg %p46
        %p438 = pneg %p70
        %p439 = pneg %p67
        %p440 = pneg %p91
        %p441 = pneg %p88
        %p442 = pneg %p112
        %p443 = pneg %p109
        %p444 = pneg %p133
        %p445 = pneg %p130
        %p446 = pneg %p154
        %p447 = pneg %p151
        %p448 = scmp.lt.s32.totalorder %s28, 1
        %s449 = scalar_select %p448, %s28, 1
        %s450 = smul.addr %s449, 2
        %s451 = smul.addr %s450, 8
        %s452 = scalar_lea.vmem %s6, %s451
        %p453 = pneg %p180
        %p454 = pneg %p177
        %p455 = pneg %p201
        %p456 = pneg %p198
        %p457 = pneg %p222
        %p458 = pneg %p219
        %p459 = pneg %p243
        %p460 = pneg %p240
        %p461 = pneg %p264
        %p462 = pneg %p261
        %p463 = pneg %p285
        %p464 = pneg %p282
        %p465 = pneg %p306
        %p466 = pneg %p303
        %p467 = pneg %p327
        %p468 = pneg %p324
        %p469 = pneg %p353
        %p470 = pneg %p350
        %s471 = sand.u32 %s340, 1
        %s472 = scalar_lea.sflag [#allocation3], %s471
        %s473 = sand.u32 %s340, 1
        %s474 = smul.addr %s473, 32
        %s475 = scalar_lea.vmem [#allocation2], %s474
        %p476 = scmp.lt.s32.totalorder %s28, 1
        %s477 = scalar_select %p476, %s28, 1
        %s478 = smul.addr %s477, 2
        %s479 = smul.addr %s478, 8
        %s480 = scalar_lea.vmem %s0, %s479
        %p481 = scmp.lt.s32.totalorder %s28, 1
        %s482 = scalar_select %p481, %s28, 1
        %s483 = smul.addr %s482, 2
        %s484 = smul.addr %s483, 8
        %s485 = scalar_lea.vmem %s6, %s484
        %v486 = vld [vmem:[%s480] sm:$0xff]
        %v487 = vld [vmem:[%s480 + $0x8] sm:$0xff]
        %v488 = vld [vmem:[%s1] sm:$0xff]
        %v489 = vld [vmem:[%s2] sm:$0xff]
        %v490 = vld [vmem:[%s3] sm:$0xff]
        %v491 = vadd.f32 %v486, %v487
        %492 = vadd.xlane.f32.xlu0 %v491
        %v493 = vpop.xlane.xlu0 %492
        %vm494 = vcmask 64512
        %v496 = vsel %vm494, %v488, 0
        %498 = vmatprep.subr.mxu0 0.0
        %499 = vmatpush1.msra.mxu0 %v493
        %500 = vmatprep.subr.mxu0 0.0
        %501 = vmatpush1.msra.mxu0 0.0
        %502 = vmatprep.subr.mxu0 0.0
        %503 = vmatpush1.msra.mxu0 0.0
        %504 = vmatprep.subr.mxu0 0.0
        %505 = vmatpush1.msra.mxu0 0.0
        %506 = vmatprep.subr.mxu0 0.0
        %507 = vmatpush1.msra.mxu0 0.0
        %508 = vmatprep.subr.mxu0 0.0
        %509 = vmatpush1.msra.mxu0 0.0
        %510 = vmatprep.subr.mxu0 0.0
        %511 = vmatpush1.msra.mxu0 0.0
        %512 = vmatprep.subr.mxu0 0.0
        %513 = vmatpush1.msra.mxu0 0.0
        %514 = vmatprep.subr.mxu0 0.0
        %515 = vmatpush1.msra.mxu0 0.0
        %516 = vmatprep.subr.mxu0 0.0
        %517 = vmatpush1.msra.mxu0 0.0
        %518 = vmatprep.subr.mxu0 0.0
        %519 = vmatpush1.msra.mxu0 0.0
        %520 = vmatprep.subr.mxu0 0.0
        %521 = vmatpush1.msra.mxu0 0.0
        %522 = vmatprep.subr.mxu0 0.0
        %523 = vmatpush1.msra.mxu0 0.0
        %524 = vmatprep.subr.mxu0 0.0
        %525 = vmatpush1.msra.mxu0 0.0
        %526 = vmatprep.subr.mxu0 0.0
        %527 = vmatpush1.msra.mxu0 0.0
        %528 = vmatprep.subr.mxu0 0.0
        %529 = vmatpush1.msra.mxu0 0.0
        %530 = vmatprep.subr.mxu0 0.0
        %531 = vmatpush1.msra.mxu0 0.0
        %532 = vmatprep.subr.mxu0 0.0
        %533 = vmatpush1.msra.mxu0 0.0
        %534 = vmatprep.subr.mxu0 0.0
        %535 = vmatpush1.msra.mxu0 0.0
        %536 = vmatprep.subr.mxu0 0.0
        %537 = vmatpush1.msra.mxu0 0.0
        %538 = vmatprep.subr.mxu0 0.0
        %539 = vmatpush1.msra.mxu0 0.0
        %540 = vmatprep.subr.mxu0 0.0
        %541 = vmatpush1.msra.mxu0 0.0
        %542 = vmatprep.subr.mxu0 0.0
        %543 = vmatpush1.msra.mxu0 0.0
        %544 = vmatprep.subr.mxu0 0.0
        %545 = vmatpush1.msra.mxu0 0.0
        %546 = vmatprep.subr.mxu0 0.0
        %547 = vmatpush1.msra.mxu0 0.0
        %548 = vmatprep.subr.mxu0 0.0
        %549 = vmatpush1.msra.mxu0 0.0
        %550 = vmatprep.subr.mxu0 0.0
        %551 = vmatpush1.msra.mxu0 0.0
        %552 = vmatprep.subr.mxu0 0.0
        %553 = vmatpush1.msra.mxu0 0.0
        %554 = vmatprep.subr.mxu0 0.0
        %555 = vmatpush1.msra.mxu0 0.0
        %556 = vmatprep.subr.mxu0 0.0
        %557 = vmatpush1.msra.mxu0 0.0
        %558 = vmatprep.subr.mxu0 0.0
        %559 = vmatpush1.msra.mxu0 0.0
        %560 = vmatprep.subr.mxu0 0.0
        %561 = vmatpush1.msra.mxu0 0.0
        %562 = vmatprep.mubr.f32.mxu0 0.0
        %563 = vmatmul.mubr.f32.gmra.mrb[0].mxu0 %v496
        %v564 = vpop.f32.mrb[0].mxu0
        %v565 = vadd.f32 0.0, %v564
        %v566 = vpop.f32.mrb[0].mxu0
        %567 = vdwg.mxu0
        %569 = vset.pattern.permute.xlu0 0
        %570 = vperm.xlu0 %569, %v565
        %v571 = vpop.permute.xlu0 %570
        %v573 = vsub.f32 %v486, %v571
        %v574 = vsub.f32 %v487, %v571
        %v575 = vmul.f32 %v573, %v573
        %v576 = vmul.f32 %v574, %v574
        %v577 = vadd.f32 %v575, %v576
        %578 = vadd.xlane.f32.xlu0 %v577
        %v579 = vpop.xlane.xlu0 %578
        %580 = vmatprep.subr.mxu0 0.0
        %581 = vmatpush1.msra.mxu0 %v579
        %582 = vmatprep.subr.mxu0 0.0
        %583 = vmatpush1.msra.mxu0 0.0
        %584 = vmatprep.subr.mxu0 0.0
        %585 = vmatpush1.msra.mxu0 0.0
        %586 = vmatprep.subr.mxu0 0.0
        %587 = vmatpush1.msra.mxu0 0.0
        %588 = vmatprep.subr.mxu0 0.0
        %589 = vmatpush1.msra.mxu0 0.0
        %590 = vmatprep.subr.mxu0 0.0
        %591 = vmatpush1.msra.mxu0 0.0
        %592 = vmatprep.subr.mxu0 0.0
        %593 = vmatpush1.msra.mxu0 0.0
        %594 = vmatprep.subr.mxu0 0.0
        %595 = vmatpush1.msra.mxu0 0.0
        %596 = vmatprep.subr.mxu0 0.0
        %597 = vmatpush1.msra.mxu0 0.0
        %598 = vmatprep.subr.mxu0 0.0
        %599 = vmatpush1.msra.mxu0 0.0
        %600 = vmatprep.subr.mxu0 0.0
        %601 = vmatpush1.msra.mxu0 0.0
        %602 = vmatprep.subr.mxu0 0.0
        %603 = vmatpush1.msra.mxu0 0.0
        %604 = vmatprep.subr.mxu0 0.0
        %605 = vmatpush1.msra.mxu0 0.0
        %606 = vmatprep.subr.mxu0 0.0
        %607 = vmatpush1.msra.mxu0 0.0
        %608 = vmatprep.subr.mxu0 0.0
        %609 = vmatpush1.msra.mxu0 0.0
        %610 = vmatprep.subr.mxu0 0.0
        %611 = vmatpush1.msra.mxu0 0.0
        %612 = vmatprep.subr.mxu0 0.0
        %613 = vmatpush1.msra.mxu0 0.0
        %614 = vmatprep.subr.mxu0 0.0
        %615 = vmatpush1.msra.mxu0 0.0
        %616 = vmatprep.subr.mxu0 0.0
        %617 = vmatpush1.msra.mxu0 0.0
        %618 = vmatprep.subr.mxu0 0.0
        %619 = vmatpush1.msra.mxu0 0.0
        %620 = vmatprep.subr.mxu0 0.0
        %621 = vmatpush1.msra.mxu0 0.0
        %622 = vmatprep.subr.mxu0 0.0
        %623 = vmatpush1.msra.mxu0 0.0
        %624 = vmatprep.subr.mxu0 0.0
        %625 = vmatpush1.msra.mxu0 0.0
        %626 = vmatprep.subr.mxu0 0.0
        %627 = vmatpush1.msra.mxu0 0.0
        %628 = vmatprep.subr.mxu0 0.0
        %629 = vmatpush1.msra.mxu0 0.0
        %630 = vmatprep.subr.mxu0 0.0
        %631 = vmatpush1.msra.mxu0 0.0
        %632 = vmatprep.subr.mxu0 0.0
        %633 = vmatpush1.msra.mxu0 0.0
        %634 = vmatprep.subr.mxu0 0.0
        %635 = vmatpush1.msra.mxu0 0.0
        %636 = vmatprep.subr.mxu0 0.0
        %637 = vmatpush1.msra.mxu0 0.0
        %638 = vmatprep.subr.mxu0 0.0
        %639 = vmatpush1.msra.mxu0 0.0
        %640 = vmatprep.subr.mxu0 0.0
        %641 = vmatpush1.msra.mxu0 0.0
        %642 = vmatprep.subr.mxu0 0.0
        %643 = vmatpush1.msra.mxu0 0.0
        %644 = vmatprep.mubr.f32.mxu0 0.0
        %645 = vmatmul.mubr.f32.gmra.mrb[0].mxu0 %v496
        %v646 = vpop.f32.mrb[0].mxu0
        %v647 = vadd.f32 1e-05, %v646
        %v648 = vpop.f32.mrb[0].mxu0
        %649 = vdwg.mxu0
        %v650 = vrsqrt.pop %v647
        %v651 = vmul.f32 %v650, %v489
        %653 = vset.pattern.permute.xlu0 0
        %654 = vperm.xlu0 %653, %v651
        %v655 = vpop.permute.xlu0 %654
        %v657 = vmul.f32 %v573, %v655
        %v658 = vmul.f32 %v574, %v655
        %660 = vset.pattern.permute.xlu0 0
        %661 = vperm.xlu0 %660, %v490
        %v662 = vpop.permute.xlu0 %661
        %v664 = vadd.f32 %v657, %v662
        %v665 = vadd.f32 %v658, %v662
        %v666 = vxor.u32 %v664, 2147483648
        %v667 = vxor.u32 %v665, 2147483648
        %v668 = vmul.f32 %v666, 1.442695
        %v669 = vpow.pop %v668
        %v670 = vmul.f32 %v667, 1.442695
        %v671 = vpow.pop %v670
        %v672 = vadd.f32 %v669, 1.0
        %v673 = vadd.f32 %v671, 1.0
        %v674 = vrcp.pop %v672
        %v675 = vmul.f32 1.0, %v674
        %v676 = vrcp.pop %v673
        %v677 = vmul.f32 1.0, %v676
        %v678 = vmul.f32 %v664, %v675
        %v679 = vmul.f32 %v665, %v677
        %v680 = vld [vmem:[%s4] sm:$0xff]
        %v681 = vld [vmem:[%s4 + $0x8] sm:$0xff]
        %684 = vrot.lane.b32.xlu0 %v678, 17
        %v685 = vpop.permute.xlu0 %684
        %686 = vrot.lane.b32.xlu0 %v679, 17
        %v687 = vpop.permute.xlu0 %686
        %vm688 = vcmask 138240
        %v689 = vsel %vm688, %v685, %v687
        %v693 = vsel %vm688, 0.0, %v685
        %v694 = vsel %vm688, %v687, 0.0
        %v695 = vlaneseq
        %v696 = vand.u32 %v695, 127
        %v697 = vadd.s32 %v696, 128
        %vm698 = vcmp.lt.s32.totalorder %v696, 0
        %v699 = vsub.s32 0, %v696
        %v700 = vsel %vm698, %v699, %v696
        %v701 = vshrl.u32 %v700, 4
        %v702 = vand.u32 %v700, 15
        %v703 = vsub.s32 0, %v702
        %v704 = vsel %vm698, %v703, %v702
        %vm705 = vcmp.lt.s32.totalorder %v697, 0
        %v706 = vsub.s32 0, %v697
        %v707 = vsel %vm705, %v706, %v697
        %v708 = vshrl.u32 %v707, 4
        %v709 = vand.u32 %v707, 15
        %v710 = vsub.s32 0, %v709
        %v711 = vsel %vm705, %v710, %v709
        %vm712 = vcmp.ne.s32.totalorder %v704, 0
        %vm713 = vcmp.ne.s32.totalorder %v711, 0
        %vm714 = vcmp.lt.s32.totalorder %v704, 0
        %vm715 = vcmp.lt.s32.totalorder %v711, 0
        %vm716 = vmand %vm714, %vm712
        %vm717 = vmand %vm715, %vm713
        %v718 = vadd.s32 %v704, 16
        %v719 = vadd.s32 %v711, 16
        %v720 = vsel %vm716, %v718, %v704
        %v721 = vsel %vm717, %v719, %v711
        %vm722 = vcmp.gt.s32.totalorder %v720, 0
        %vm723 = vcmp.gt.s32.totalorder %v721, 0
        %v724 = vsel %vm722, 1, 0
        %v725 = vsel %vm723, 1, 0
        %v726 = vcvt.s32.f32 %v724
        %v727 = vcvt.s32.f32 %v725
        %vm728 = vcmp.lt.s32.totalorder %v720, 15
        %vm729 = vcmp.lt.s32.totalorder %v721, 15
        %v730 = vsel %vm728, 1, 0
        %v731 = vsel %vm729, 1, 0
        %v732 = vcvt.s32.f32 %v730
        %v733 = vcvt.s32.f32 %v731
        %v734 = vmul.f32 %v693, %v726
        %v735 = vmul.f32 %v689, %v727
        %738 = vrot.lane.b32.xlu0 %v732, 2
        %v739 = vpop.permute.xlu0 %738
        %740 = vrot.lane.b32.xlu0 %v733, 2
        %v741 = vpop.permute.xlu0 %740
        %vm742 = vcmask 15360
        %v743 = vsel %vm742, %v739, %v741
        %v747 = vmul.f32 %v693, %v739
        %v748 = vmul.f32 %v689, %v743
        %v749 = vmul.f32 %v694, %v741
        %752 = vrot.lane.b32.xlu0 %v726, 16
        %v753 = vpop.permute.xlu0 %752
        %754 = vrot.lane.b32.xlu0 %v727, 16
        %v755 = vpop.permute.xlu0 %754
        %vm756 = vcmask 130048
        %v757 = vsel %vm756, %v753, %v755
        %v761 = vmul.f32 %v693, %v753
        %v762 = vmul.f32 %v689, %v757
        %v763 = vmul.f32 %v694, %v755
        %764 = vrot.lane.b32.xlu0 %v732, 18
        %v765 = vpop.permute.xlu0 %764
        %766 = vrot.lane.b32.xlu0 %v733, 18
        %v767 = vpop.permute.xlu0 %766
        %vm768 = vcmask 146432
        %v769 = vsel %vm768, %v765, %v767
        %v773 = vmul.f32 %v693, %v765
        %v774 = vmul.f32 %v689, %v769
        %v775 = vmul.f32 %v694, %v767
        %776 = vrot.lane.b32.xlu0 %v726, 32
        %v777 = vpop.permute.xlu0 %776
        %778 = vrot.lane.b32.xlu0 %v727, 32
        %v779 = vpop.permute.xlu0 %778
        %vm780 = vcmask 261120
        %v781 = vsel %vm780, %v777, %v779
        %v785 = vmul.f32 %v693, %v777
        %v786 = vmul.f32 %v689, %v781
        %v787 = vmul.f32 %v694, %v779
        %788 = vrot.lane.b32.xlu0 %v732, 34
        %v789 = vpop.permute.xlu0 %788
        %790 = vrot.lane.b32.xlu0 %v733, 34
        %v791 = vpop.permute.xlu0 %790
        %vm792 = vcmask 277504
        %v793 = vsel %vm792, %v789, %v791
        %v797 = vmul.f32 %v693, %v789
        %v798 = vmul.f32 %v689, %v793
        %v799 = vmul.f32 %v694, %v791
        %802 = vrot.lane.b32.xlu0 %v693, 127
        %v803 = vpop.permute.xlu0 %802
        %804 = vrot.lane.b32.xlu0 %v689, 127
        %v805 = vpop.permute.xlu0 %804
        %806 = vrot.lane.b32.xlu0 %v694, 127
        %v807 = vpop.permute.xlu0 %806
        %vm808 = vcmask 1039360
        %v809 = vsel %vm808, %v803, %v805
        %v810 = vsel %vm808, %v805, %v807
        %816 = vrot.lane.b32.xlu0 %v747, 126
        %v817 = vpop.permute.xlu0 %816
        %818 = vrot.lane.b32.xlu0 %v748, 126
        %v819 = vpop.permute.xlu0 %818
        %820 = vrot.lane.b32.xlu0 %v749, 126
        %v821 = vpop.permute.xlu0 %820
        %vm822 = vcmask 1031168
        %v823 = vsel %vm822, %v817, %v819
        %v824 = vsel %vm822, %v819, %v821
        %830 = vrot.lane.b32.xlu0 %v761, 112
        %v831 = vpop.permute.xlu0 %830
        %832 = vrot.lane.b32.xlu0 %v762, 112
        %v833 = vpop.permute.xlu0 %832
        %834 = vrot.lane.b32.xlu0 %v763, 112
        %v835 = vpop.permute.xlu0 %834
        %vm836 = vcmask 916480
        %v837 = vsel %vm836, %v831, %v833
        %v838 = vsel %vm836, %v833, %v835
        %841 = vrot.lane.b32.xlu0 %v693, 111
        %v842 = vpop.permute.xlu0 %841
        %843 = vrot.lane.b32.xlu0 %v689, 111
        %v844 = vpop.permute.xlu0 %843
        %845 = vrot.lane.b32.xlu0 %v694, 111
        %v846 = vpop.permute.xlu0 %845
        %vm847 = vcmask 908288
        %v848 = vsel %vm847, %v842, %v844
        %v849 = vsel %vm847, %v844, %v846
        %855 = vrot.lane.b32.xlu0 %v773, 110
        %v856 = vpop.permute.xlu0 %855
        %857 = vrot.lane.b32.xlu0 %v774, 110
        %v858 = vpop.permute.xlu0 %857
        %859 = vrot.lane.b32.xlu0 %v775, 110
        %v860 = vpop.permute.xlu0 %859
        %vm861 = vcmask 900096
        %v862 = vsel %vm861, %v856, %v858
        %v863 = vsel %vm861, %v858, %v860
        %869 = vrot.lane.b32.xlu0 %v785, 96
        %v870 = vpop.permute.xlu0 %869
        %871 = vrot.lane.b32.xlu0 %v786, 96
        %v872 = vpop.permute.xlu0 %871
        %873 = vrot.lane.b32.xlu0 %v787, 96
        %v874 = vpop.permute.xlu0 %873
        %vm875 = vcmask 785408
        %v876 = vsel %vm875, %v870, %v872
        %v877 = vsel %vm875, %v872, %v874
        %880 = vrot.lane.b32.xlu0 %v693, 95
        %v881 = vpop.permute.xlu0 %880
        %882 = vrot.lane.b32.xlu0 %v689, 95
        %v883 = vpop.permute.xlu0 %882
        %884 = vrot.lane.b32.xlu0 %v694, 95
        %v885 = vpop.permute.xlu0 %884
        %vm886 = vcmask 777216
        %v887 = vsel %vm886, %v881, %v883
        %v888 = vsel %vm886, %v883, %v885
        %894 = vrot.lane.b32.xlu0 %v797, 94
        %v895 = vpop.permute.xlu0 %894
        %896 = vrot.lane.b32.xlu0 %v798, 94
        %v897 = vpop.permute.xlu0 %896
        %898 = vrot.lane.b32.xlu0 %v799, 94
        %v899 = vpop.permute.xlu0 %898
        %vm900 = vcmask 769024
        %v901 = vsel %vm900, %v895, %v897
        %v902 = vsel %vm900, %v897, %v899
        %v905 = vld [vmem:[%s5] sm:$0xff]
        %v906 = vld [vmem:[%s5 + $0x8] sm:$0xff]
        %908 = vset.pattern.permute.xlu0 0
        %909 = vperm.xlu0 %908, %v905
        %v910 = vpop.permute.xlu0 %909
        %913 = vset.pattern.permute.xlu0 0
        %914 = vperm.xlu0 %913, %v906
        %v915 = vpop.permute.xlu0 %914
        %vm917 = vcmask 588800
        %v919 = vsel %vm917, %v680, 0
        %v922 = vsel %vm917, %v681, 0
        %924 = vmatprep.subr.mxu0 %v735
        %925 = vmatpush1.msra.mxu0 %v734
        %926 = vmatprep.subr.mxu0 %v810
        %927 = vmatpush1.msra.mxu0 %v809
        %928 = vmatprep.subr.mxu0 %v824
        %929 = vmatpush1.msra.mxu0 %v823
        %930 = vmatprep.subr.mxu0 %v838
        %931 = vmatpush1.msra.mxu0 %v837
        %932 = vmatprep.subr.mxu0 %v849
        %933 = vmatpush1.msra.mxu0 %v848
        %934 = vmatprep.subr.mxu0 %v863
        %935 = vmatpush1.msra.mxu0 %v862
        %936 = vmatprep.subr.mxu0 %v877
        %937 = vmatpush1.msra.mxu0 %v876
        %938 = vmatprep.subr.mxu0 %v888
        %939 = vmatpush1.msra.mxu0 %v887
        %940 = vmatprep.subr.mxu0 %v902
        %941 = vmatpush1.msra.mxu0 %v901
        %942 = vmatprep.subr.mxu0 0.0
        %943 = vmatpush1.msra.mxu0 0.0
        %944 = vmatprep.subr.mxu0 0.0
        %945 = vmatpush1.msra.mxu0 0.0
        %946 = vmatprep.subr.mxu0 0.0
        %947 = vmatpush1.msra.mxu0 0.0
        %948 = vmatprep.subr.mxu0 0.0
        %949 = vmatpush1.msra.mxu0 0.0
        %950 = vmatprep.subr.mxu0 0.0
        %951 = vmatpush1.msra.mxu0 0.0
        %952 = vmatprep.subr.mxu0 0.0
        %953 = vmatpush1.msra.mxu0 0.0
        %954 = vmatprep.subr.mxu0 0.0
        %955 = vmatpush1.msra.mxu0 0.0
        %956 = vmatprep.subr.mxu0 0.0
        %957 = vmatpush1.msra.mxu0 0.0
        %958 = vmatprep.subr.mxu0 0.0
        %959 = vmatpush1.msra.mxu0 0.0
        %960 = vmatprep.subr.mxu0 0.0
        %961 = vmatpush1.msra.mxu0 0.0
        %962 = vmatprep.subr.mxu0 0.0
        %963 = vmatpush1.msra.mxu0 0.0
        %964 = vmatprep.subr.mxu0 0.0
        %965 = vmatpush1.msra.mxu0 0.0
        %966 = vmatprep.subr.mxu0 0.0
        %967 = vmatpush1.msra.mxu0 0.0
        %968 = vmatprep.subr.mxu0 0.0
        %969 = vmatpush1.msra.mxu0 0.0
        %970 = vmatprep.subr.mxu0 0.0
        %971 = vmatpush1.msra.mxu0 0.0
        %972 = vmatprep.subr.mxu0 0.0
        %973 = vmatpush1.msra.mxu0 0.0
        %974 = vmatprep.subr.mxu0 0.0
        %975 = vmatpush1.msra.mxu0 0.0
        %976 = vmatprep.subr.mxu0 0.0
        %977 = vmatpush1.msra.mxu0 0.0
        %978 = vmatprep.subr.mxu0 0.0
        %979 = vmatpush1.msra.mxu0 0.0
        %980 = vmatprep.subr.mxu0 0.0
        %981 = vmatpush1.msra.mxu0 0.0
        %982 = vmatprep.subr.mxu0 0.0
        %983 = vmatpush1.msra.mxu0 0.0
        %984 = vmatprep.subr.mxu0 0.0
        %985 = vmatpush1.msra.mxu0 0.0
        %986 = vmatprep.subr.mxu0 0.0
        %987 = vmatpush1.msra.mxu0 0.0
        %988 = vmatprep.mubr.f32.mxu0 0.0
        %989 = vmatmul.mubr.f32.gmra.mrb[0].mxu0 %v919
        %v990 = vpop.f32.mrb[0].mxu0
        %v991 = vadd.f32 %v910, %v990
        %v992 = vpop.f32.mrb[0].mxu0
        %v993 = vadd.f32 %v910, %v992
        %994 = vmatprep.mubr.f32.mxu0 0.0
        %995 = vmatmul.mubr.f32.gmra.mrb[0].mxu0 %v922
        %v996 = vpop.f32.mrb[0].mxu0
        %v997 = vadd.f32 %v915, %v996
        %v998 = vpop.f32.mrb[0].mxu0
        %v999 = vadd.f32 %v915, %v998
        %1000 = vdwg.mxu0
        %v1001 = vld [vmem:[%s485] sm:$0xff]
        %v1002 = vld [vmem:[%s485 + $0x8] sm:$0xff]
        %1004 = vset.pattern.permute.xlu0 0
        %1005 = vperm.xlu0 %1004, %v1001
        %v1006 = vpop.permute.xlu0 %1005
        %1009 = vset.pattern.permute.xlu0 0
        %1010 = vperm.xlu0 %1009, %v1002
        %v1011 = vpop.permute.xlu0 %1010
        %v1013 = vadd.f32 %v991, %v1006
        %v1014 = vadd.f32 %v993, %v1006
        %v1015 = vadd.f32 %v997, %v1011
        %v1016 = vadd.f32 %v999, %v1011
        %v1017 = vld [vmem:[%s7] sm:$0xff]
        %v1018 = vld [vmem:[%s7 + $0x8] sm:$0xff]
        %v1019 = vld [vmem:[%s8] sm:$0xff]
        %v1020 = vld [vmem:[%s8 + $0x8] sm:$0xff]
        %v1021 = vld [vmem:[%s9] sm:$0xff]
        %v1022 = vld [vmem:[%s9 + $0x8] sm:$0xff]
        %v1023 = vadd.f32 %v1013, %v1014
        %1024 = vadd.xlane.f32.xlu0 %v1023
        %v1025 = vpop.xlane.xlu0 %1024
        %v1026 = vadd.f32 %v1015, %v1016
        %1027 = vadd.xlane.f32.xlu0 %v1026
        %v1028 = vpop.xlane.xlu0 %1027
        %v1030 = vsel %vm756, %v1017, 0
        %v1033 = vsel %vm756, %v1018, 0
        %1035 = vmatprep.subr.mxu0 0.0
        %1036 = vmatpush1.msra.mxu0 %v1025
        %1037 = vmatprep.subr.mxu0 0.0
        %1038 = vmatpush1.msra.mxu0 %v1028
        %1039 = vmatprep.subr.mxu0 0.0
        %1040 = vmatpush1.msra.mxu0 0.0
        %1041 = vmatprep.subr.mxu0 0.0
        %1042 = vmatpush1.msra.mxu0 0.0
        %1043 = vmatprep.subr.mxu0 0.0
        %1044 = vmatpush1.msra.mxu0 0.0
        %1045 = vmatprep.subr.mxu0 0.0
        %1046 = vmatpush1.msra.mxu0 0.0
        %1047 = vmatprep.subr.mxu0 0.0
        %1048 = vmatpush1.msra.mxu0 0.0
        %1049 = vmatprep.subr.mxu0 0.0
        %1050 = vmatpush1.msra.mxu0 0.0
        %1051 = vmatprep.subr.mxu0 0.0
        %1052 = vmatpush1.msra.mxu0 0.0
        %1053 = vmatprep.subr.mxu0 0.0
        %1054 = vmatpush1.msra.mxu0 0.0
        %1055 = vmatprep.subr.mxu0 0.0
        %1056 = vmatpush1.msra.mxu0 0.0
        %1057 = vmatprep.subr.mxu0 0.0
        %1058 = vmatpush1.msra.mxu0 0.0
        %1059 = vmatprep.subr.mxu0 0.0
        %1060 = vmatpush1.msra.mxu0 0.0
        %1061 = vmatprep.subr.mxu0 0.0
        %1062 = vmatpush1.msra.mxu0 0.0
        %1063 = vmatprep.subr.mxu0 0.0
        %1064 = vmatpush1.msra.mxu0 0.0
        %1065 = vmatprep.subr.mxu0 0.0
        %1066 = vmatpush1.msra.mxu0 0.0
        %1067 = vmatprep.subr.mxu0 0.0
        %1068 = vmatpush1.msra.mxu0 0.0
        %1069 = vmatprep.subr.mxu0 0.0
        %1070 = vmatpush1.msra.mxu0 0.0
        %1071 = vmatprep.subr.mxu0 0.0
        %1072 = vmatpush1.msra.mxu0 0.0
        %1073 = vmatprep.subr.mxu0 0.0
        %1074 = vmatpush1.msra.mxu0 0.0
        %1075 = vmatprep.subr.mxu0 0.0
        %1076 = vmatpush1.msra.mxu0 0.0
        %1077 = vmatprep.subr.mxu0 0.0
        %1078 = vmatpush1.msra.mxu0 0.0
        %1079 = vmatprep.subr.mxu0 0.0
        %1080 = vmatpush1.msra.mxu0 0.0
        %1081 = vmatprep.subr.mxu0 0.0
        %1082 = vmatpush1.msra.mxu0 0.0
        %1083 = vmatprep.subr.mxu0 0.0
        %1084 = vmatpush1.msra.mxu0 0.0
        %1085 = vmatprep.subr.mxu0 0.0
        %1086 = vmatpush1.msra.mxu0 0.0
        %1087 = vmatprep.subr.mxu0 0.0
        %1088 = vmatpush1.msra.mxu0 0.0
        %1089 = vmatprep.subr.mxu0 0.0
        %1090 = vmatpush1.msra.mxu0 0.0
        %1091 = vmatprep.subr.mxu0 0.0
        %1092 = vmatpush1.msra.mxu0 0.0
        %1093 = vmatprep.subr.mxu0 0.0
        %1094 = vmatpush1.msra.mxu0 0.0
        %1095 = vmatprep.subr.mxu0 0.0
        %1096 = vmatpush1.msra.mxu0 0.0
        %1097 = vmatprep.subr.mxu0 0.0
        %1098 = vmatpush1.msra.mxu0 0.0
        %1099 = vmatprep.mubr.f32.mxu0 0.0
        %1100 = vmatmul.mubr.f32.gmra.mrb[0].mxu0 %v1030
        %v1101 = vpop.f32.mrb[0].mxu0
        %v1102 = vadd.f32 0.0, %v1101
        %v1103 = vpop.f32.mrb[0].mxu0
        %1104 = vmatprep.mubr.f32.mxu0 0.0
        %1105 = vmatmul.mubr.f32.gmra.mrb[0].mxu0 %v1033
        %v1106 = vpop.f32.mrb[0].mxu0
        %v1107 = vadd.f32 0.0, %v1106
        %v1108 = vpop.f32.mrb[0].mxu0
        %1109 = vdwg.mxu0
        %1111 = vset.pattern.permute.xlu0 0
        %1112 = vperm.xlu0 %1111, %v1102
        %v1113 = vpop.permute.xlu0 %1112
        %1116 = vset.pattern.permute.xlu0 0
        %1117 = vperm.xlu0 %1116, %v1107
        %v1118 = vpop.permute.xlu0 %1117
        %v1120 = vsub.f32 %v1013, %v1113
        %v1121 = vsub.f32 %v1014, %v1113
        %v1122 = vsub.f32 %v1015, %v1118
        %v1123 = vsub.f32 %v1016, %v1118
        %v1124 = vmul.f32 %v1120, %v1120
        %v1125 = vmul.f32 %v1121, %v1121
        %v1126 = vmul.f32 %v1122, %v1122
        %v1127 = vmul.f32 %v1123, %v1123
        %v1128 = vadd.f32 %v1124, %v1125
        %1129 = vadd.xlane.f32.xlu0 %v1128
        %v1130 = vpop.xlane.xlu0 %1129
        %v1131 = vadd.f32 %v1126, %v1127
        %1132 = vadd.xlane.f32.xlu0 %v1131
        %v1133 = vpop.xlane.xlu0 %1132
        %1134 = vmatprep.subr.mxu0 0.0
        %1135 = vmatpush1.msra.mxu0 %v1130
        %1136 = vmatprep.subr.mxu0 0.0
        %1137 = vmatpush1.msra.mxu0 %v1133
        %1138 = vmatprep.subr.mxu0 0.0
        %1139 = vmatpush1.msra.mxu0 0.0
        %1140 = vmatprep.subr.mxu0 0.0
        %1141 = vmatpush1.msra.mxu0 0.0
        %1142 = vmatprep.subr.mxu0 0.0
        %1143 = vmatpush1.msra.mxu0 0.0
        %1144 = vmatprep.subr.mxu0 0.0
        %1145 = vmatpush1.msra.mxu0 0.0
        %1146 = vmatprep.subr.mxu0 0.0
        %1147 = vmatpush1.msra.mxu0 0.0
        %1148 = vmatprep.subr.mxu0 0.0
        %1149 = vmatpush1.msra.mxu0 0.0
        %1150 = vmatprep.subr.mxu0 0.0
        %1151 = vmatpush1.msra.mxu0 0.0
        %1152 = vmatprep.subr.mxu0 0.0
        %1153 = vmatpush1.msra.mxu0 0.0
        %1154 = vmatprep.subr.mxu0 0.0
        %1155 = vmatpush1.msra.mxu0 0.0
        %1156 = vmatprep.subr.mxu0 0.0
        %1157 = vmatpush1.msra.mxu0 0.0
        %1158 = vmatprep.subr.mxu0 0.0
        %1159 = vmatpush1.msra.mxu0 0.0
        %1160 = vmatprep.subr.mxu0 0.0
        %1161 = vmatpush1.msra.mxu0 0.0
        %1162 = vmatprep.subr.mxu0 0.0
        %1163 = vmatpush1.msra.mxu0 0.0
        %1164 = vmatprep.subr.mxu0 0.0
        %1165 = vmatpush1.msra.mxu0 0.0
        %1166 = vmatprep.subr.mxu0 0.0
        %1167 = vmatpush1.msra.mxu0 0.0
        %1168 = vmatprep.subr.mxu0 0.0
        %1169 = vmatpush1.msra.mxu0 0.0
        %1170 = vmatprep.subr.mxu0 0.0
        %1171 = vmatpush1.msra.mxu0 0.0
        %1172 = vmatprep.subr.mxu0 0.0
        %1173 = vmatpush1.msra.mxu0 0.0
        %1174 = vmatprep.subr.mxu0 0.0
        %1175 = vmatpush1.msra.mxu0 0.0
        %1176 = vmatprep.subr.mxu0 0.0
        %1177 = vmatpush1.msra.mxu0 0.0
        %1178 = vmatprep.subr.mxu0 0.0
        %1179 = vmatpush1.msra.mxu0 0.0
        %1180 = vmatprep.subr.mxu0 0.0
        %1181 = vmatpush1.msra.mxu0 0.0
        %1182 = vmatprep.subr.mxu0 0.0
        %1183 = vmatpush1.msra.mxu0 0.0
        %1184 = vmatprep.subr.mxu0 0.0
        %1185 = vmatpush1.msra.mxu0 0.0
        %1186 = vmatprep.subr.mxu0 0.0
        %1187 = vmatpush1.msra.mxu0 0.0
        %1188 = vmatprep.subr.mxu0 0.0
        %1189 = vmatpush1.msra.mxu0 0.0
        %1190 = vmatprep.subr.mxu0 0.0
        %1191 = vmatpush1.msra.mxu0 0.0
        %1192 = vmatprep.subr.mxu0 0.0
        %1193 = vmatpush1.msra.mxu0 0.0
        %1194 = vmatprep.subr.mxu0 0.0
        %1195 = vmatpush1.msra.mxu0 0.0
        %1196 = vmatprep.subr.mxu0 0.0
        %1197 = vmatpush1.msra.mxu0 0.0
        %1198 = vmatprep.mubr.f32.mxu0 0.0
        %1199 = vmatmul.mubr.f32.gmra.mrb[0].mxu0 %v1030
        %v1200 = vpop.f32.mrb[0].mxu0
        %v1201 = vadd.f32 1e-05, %v1200
        %v1202 = vpop.f32.mrb[0].mxu0
        %1203 = vmatprep.mubr.f32.mxu0 0.0
        %1204 = vmatmul.mubr.f32.gmra.mrb[0].mxu0 %v1033
        %v1205 = vpop.f32.mrb[0].mxu0
        %v1206 = vadd.f32 1e-05, %v1205
        %v1207 = vpop.f32.mrb[0].mxu0
        %1208 = vdwg.mxu0
        %v1209 = vrsqrt.pop %v1201
        %v1210 = vrsqrt.pop %v1206
        %v1211 = vmul.f32 %v1209, %v1019
        %v1212 = vmul.f32 %v1210, %v1020
        %1214 = vset.pattern.permute.xlu0 0
        %1215 = vperm.xlu0 %1214, %v1211
        %v1216 = vpop.permute.xlu0 %1215
        %1219 = vset.pattern.permute.xlu0 0
        %1220 = vperm.xlu0 %1219, %v1212
        %v1221 = vpop.permute.xlu0 %1220
        %v1223 = vmul.f32 %v1120, %v1216
        %v1224 = vmul.f32 %v1121, %v1216
        %v1225 = vmul.f32 %v1122, %v1221
        %v1226 = vmul.f32 %v1123, %v1221
        %1228 = vset.pattern.permute.xlu0 0
        %1229 = vperm.xlu0 %1228, %v1021
        %v1230 = vpop.permute.xlu0 %1229
        %1233 = vset.pattern.permute.xlu0 0
        %1234 = vperm.xlu0 %1233, %v1022
        %v1235 = vpop.permute.xlu0 %1234
        %v1237 = vadd.f32 %v1223, %v1230
        %v1238 = vadd.f32 %v1224, %v1230
        %v1239 = vadd.f32 %v1225, %v1235
        %v1240 = vadd.f32 %v1226, %v1235
        %v1241 = vxor.u32 %v1237, 2147483648
        %v1242 = vxor.u32 %v1238, 2147483648
        %v1243 = vxor.u32 %v1239, 2147483648
        %v1244 = vxor.u32 %v1240, 2147483648
        %v1245 = vmul.f32 %v1241, 1.442695
        %v1246 = vpow.pop %v1245
        %v1247 = vmul.f32 %v1242, 1.442695
        %v1248 = vpow.pop %v1247
        %v1249 = vmul.f32 %v1243, 1.442695
        %v1250 = vpow.pop %v1249
        %v1251 = vmul.f32 %v1244, 1.442695
        %v1252 = vpow.pop %v1251
        %v1253 = vadd.f32 %v1246, 1.0
        %v1254 = vadd.f32 %v1248, 1.0
        %v1255 = vadd.f32 %v1250, 1.0
        %v1256 = vadd.f32 %v1252, 1.0
        %v1257 = vrcp.pop %v1253
        %v1258 = vmul.f32 1.0, %v1257
        %v1259 = vrcp.pop %v1254
        %v1260 = vmul.f32 1.0, %v1259
        %v1261 = vrcp.pop %v1255
        %v1262 = vmul.f32 1.0, %v1261
        %v1263 = vrcp.pop %v1256
        %v1264 = vmul.f32 1.0, %v1263
        %v1265 = vmul.f32 %v1237, %v1258
        %v1266 = vmul.f32 %v1238, %v1260
        %v1267 = vmul.f32 %v1239, %v1262
        %v1268 = vmul.f32 %v1240, %v1264
        %v1269 = vld [vmem:[%s10] sm:$0xff]
        %v1270 = vld [vmem:[%s10 + $0x8] sm:$0xff]
        %v1271 = vld [vmem:[%s10 + $0x10] sm:$0xff]
        %v1272 = vld [vmem:[%s10 + $0x18] sm:$0xff]
        %1277 = vrot.lane.b32.xlu0 %v1265, 17
        %v1278 = vpop.permute.xlu0 %1277
        %1279 = vrot.lane.b32.xlu0 %v1266, 17
        %v1280 = vpop.permute.xlu0 %1279
        %1281 = vrot.lane.b32.xlu0 %v1267, 17
        %v1282 = vpop.permute.xlu0 %1281
        %1283 = vrot.lane.b32.xlu0 %v1268, 17
        %v1284 = vpop.permute.xlu0 %1283
        %v1285 = vsel %vm688, %v1278, %v1280
        %v1286 = vsel %vm688, %v1282, %v1284
        %v1293 = vsel %vm688, 0.0, %v1278
        %v1294 = vsel %vm688, 0.0, %v1282
        %v1295 = vsel %vm688, %v1280, 0.0
        %v1296 = vsel %vm688, %v1284, 0.0
        %v1297 = vmul.f32 %v1293, %v726
        %v1298 = vmul.f32 %v1285, %v727
        %v1299 = vmul.f32 %v1294, %v726
        %v1300 = vmul.f32 %v1286, %v727
        %v1301 = vmul.f32 %v1293, %v739
        %v1302 = vmul.f32 %v1285, %v743
        %v1303 = vmul.f32 %v1295, %v741
        %v1304 = vmul.f32 %v1294, %v739
        %v1305 = vmul.f32 %v1286, %v743
        %v1306 = vmul.f32 %v1296, %v741
        %v1307 = vmul.f32 %v1293, %v753
        %v1308 = vmul.f32 %v1285, %v757
        %v1309 = vmul.f32 %v1295, %v755
        %v1310 = vmul.f32 %v1294, %v753
        %v1311 = vmul.f32 %v1286, %v757
        %v1312 = vmul.f32 %v1296, %v755
        %v1313 = vmul.f32 %v1293, %v765
        %v1314 = vmul.f32 %v1285, %v769
        %v1315 = vmul.f32 %v1295, %v767
        %v1316 = vmul.f32 %v1294, %v765
        %v1317 = vmul.f32 %v1286, %v769
        %v1318 = vmul.f32 %v1296, %v767
        %v1319 = vmul.f32 %v1293, %v777
        %v1320 = vmul.f32 %v1285, %v781
        %v1321 = vmul.f32 %v1295, %v779
        %v1322 = vmul.f32 %v1294, %v777
        %v1323 = vmul.f32 %v1286, %v781
        %v1324 = vmul.f32 %v1296, %v779
        %v1325 = vmul.f32 %v1293, %v789
        %v1326 = vmul.f32 %v1285, %v793
        %v1327 = vmul.f32 %v1295, %v791
        %v1328 = vmul.f32 %v1294, %v789
        %v1329 = vmul.f32 %v1286, %v793
        %v1330 = vmul.f32 %v1296, %v791
        %1335 = vrot.lane.b32.xlu0 %v1293, 127
        %v1336 = vpop.permute.xlu0 %1335
        %1337 = vrot.lane.b32.xlu0 %v1285, 127
        %v1338 = vpop.permute.xlu0 %1337
        %1339 = vrot.lane.b32.xlu0 %v1295, 127
        %v1340 = vpop.permute.xlu0 %1339
        %1341 = vrot.lane.b32.xlu0 %v1294, 127
        %v1342 = vpop.permute.xlu0 %1341
        %1343 = vrot.lane.b32.xlu0 %v1286, 127
        %v1344 = vpop.permute.xlu0 %1343
        %1345 = vrot.lane.b32.xlu0 %v1296, 127
        %v1346 = vpop.permute.xlu0 %1345
        %v1347 = vsel %vm808, %v1336, %v1338
        %v1348 = vsel %vm808, %v1338, %v1340
        %v1349 = vsel %vm808, %v1342, %v1344
        %v1350 = vsel %vm808, %v1344, %v1346
        %1361 = vrot.lane.b32.xlu0 %v1301, 126
        %v1362 = vpop.permute.xlu0 %1361
        %1363 = vrot.lane.b32.xlu0 %v1302, 126
        %v1364 = vpop.permute.xlu0 %1363
        %1365 = vrot.lane.b32.xlu0 %v1303, 126
        %v1366 = vpop.permute.xlu0 %1365
        %1367 = vrot.lane.b32.xlu0 %v1304, 126
        %v1368 = vpop.permute.xlu0 %1367
        %1369 = vrot.lane.b32.xlu0 %v1305, 126
        %v1370 = vpop.permute.xlu0 %1369
        %1371 = vrot.lane.b32.xlu0 %v1306, 126
        %v1372 = vpop.permute.xlu0 %1371
        %v1373 = vsel %vm822, %v1362, %v1364
        %v1374 = vsel %vm822, %v1364, %v1366
        %v1375 = vsel %vm822, %v1368, %v1370
        %v1376 = vsel %vm822, %v1370, %v1372
        %1387 = vrot.lane.b32.xlu0 %v1307, 112
        %v1388 = vpop.permute.xlu0 %1387
        %1389 = vrot.lane.b32.xlu0 %v1308, 112
        %v1390 = vpop.permute.xlu0 %1389
        %1391 = vrot.lane.b32.xlu0 %v1309, 112
        %v1392 = vpop.permute.xlu0 %1391
        %1393 = vrot.lane.b32.xlu0 %v1310, 112
        %v1394 = vpop.permute.xlu0 %1393
        %1395 = vrot.lane.b32.xlu0 %v1311, 112
        %v1396 = vpop.permute.xlu0 %1395
        %1397 = vrot.lane.b32.xlu0 %v1312, 112
        %v1398 = vpop.permute.xlu0 %1397
        %v1399 = vsel %vm836, %v1388, %v1390
        %v1400 = vsel %vm836, %v1390, %v1392
        %v1401 = vsel %vm836, %v1394, %v1396
        %v1402 = vsel %vm836, %v1396, %v1398
        %1407 = vrot.lane.b32.xlu0 %v1293, 111
        %v1408 = vpop.permute.xlu0 %1407
        %1409 = vrot.lane.b32.xlu0 %v1285, 111
        %v1410 = vpop.permute.xlu0 %1409
        %1411 = vrot.lane.b32.xlu0 %v1295, 111
        %v1412 = vpop.permute.xlu0 %1411
        %1413 = vrot.lane.b32.xlu0 %v1294, 111
        %v1414 = vpop.permute.xlu0 %1413
        %1415 = vrot.lane.b32.xlu0 %v1286, 111
        %v1416 = vpop.permute.xlu0 %1415
        %1417 = vrot.lane.b32.xlu0 %v1296, 111
        %v1418 = vpop.permute.xlu0 %1417
        %v1419 = vsel %vm847, %v1408, %v1410
        %v1420 = vsel %vm847, %v1410, %v1412
        %v1421 = vsel %vm847, %v1414, %v1416
        %v1422 = vsel %vm847, %v1416, %v1418
        %1433 = vrot.lane.b32.xlu0 %v1313, 110
        %v1434 = vpop.permute.xlu0 %1433
        %1435 = vrot.lane.b32.xlu0 %v1314, 110
        %v1436 = vpop.permute.xlu0 %1435
        %1437 = vrot.lane.b32.xlu0 %v1315, 110
        %v1438 = vpop.permute.xlu0 %1437
        %1439 = vrot.lane.b32.xlu0 %v1316, 110
        %v1440 = vpop.permute.xlu0 %1439
        %1441 = vrot.lane.b32.xlu0 %v1317, 110
        %v1442 = vpop.permute.xlu0 %1441
        %1443 = vrot.lane.b32.xlu0 %v1318, 110
        %v1444 = vpop.permute.xlu0 %1443
        %v1445 = vsel %vm861, %v1434, %v1436
        %v1446 = vsel %vm861, %v1436, %v1438
        %v1447 = vsel %vm861, %v1440, %v1442
        %v1448 = vsel %vm861, %v1442, %v1444
        %1459 = vrot.lane.b32.xlu0 %v1319, 96
        %v1460 = vpop.permute.xlu0 %1459
        %1461 = vrot.lane.b32.xlu0 %v1320, 96
        %v1462 = vpop.permute.xlu0 %1461
        %1463 = vrot.lane.b32.xlu0 %v1321, 96
        %v1464 = vpop.permute.xlu0 %1463
        %1465 = vrot.lane.b32.xlu0 %v1322, 96
        %v1466 = vpop.permute.xlu0 %1465
        %1467 = vrot.lane.b32.xlu0 %v1323, 96
        %v1468 = vpop.permute.xlu0 %1467
        %1469 = vrot.lane.b32.xlu0 %v1324, 96
        %v1470 = vpop.permute.xlu0 %1469
        %v1471 = vsel %vm875, %v1460, %v1462
        %v1472 = vsel %vm875, %v1462, %v1464
        %v1473 = vsel %vm875, %v1466, %v1468
        %v1474 = vsel %vm875, %v1468, %v1470
        %1479 = vrot.lane.b32.xlu0 %v1293, 95
        %v1480 = vpop.permute.xlu0 %1479
        %1481 = vrot.lane.b32.xlu0 %v1285, 95
        %v1482 = vpop.permute.xlu0 %1481
        %1483 = vrot.lane.b32.xlu0 %v1295, 95
        %v1484 = vpop.permute.xlu0 %1483
        %1485 = vrot.lane.b32.xlu0 %v1294, 95
        %v1486 = vpop.permute.xlu0 %1485
        %1487 = vrot.lane.b32.xlu0 %v1286, 95
        %v1488 = vpop.permute.xlu0 %1487
        %1489 = vrot.lane.b32.xlu0 %v1296, 95
        %v1490 = vpop.permute.xlu0 %1489
        %v1491 = vsel %vm886, %v1480, %v1482
        %v1492 = vsel %vm886, %v1482, %v1484
        %v1493 = vsel %vm886, %v1486, %v1488
        %v1494 = vsel %vm886, %v1488, %v1490
        %1505 = vrot.lane.b32.xlu0 %v1325, 94
        %v1506 = vpop.permute.xlu0 %1505
        %1507 = vrot.lane.b32.xlu0 %v1326, 94
        %v1508 = vpop.permute.xlu0 %1507
        %1509 = vrot.lane.b32.xlu0 %v1327, 94
        %v1510 = vpop.permute.xlu0 %1509
        %1511 = vrot.lane.b32.xlu0 %v1328, 94
        %v1512 = vpop.permute.xlu0 %1511
        %1513 = vrot.lane.b32.xlu0 %v1329, 94
        %v1514 = vpop.permute.xlu0 %1513
        %1515 = vrot.lane.b32.xlu0 %v1330, 94
        %v1516 = vpop.permute.xlu0 %1515
        %v1517 = vsel %vm900, %v1506, %v1508
        %v1518 = vsel %vm900, %v1508, %v1510
        %v1519 = vsel %vm900, %v1512, %v1514
        %v1520 = vsel %vm900, %v1514, %v1516
        %v1525 = vld [vmem:[%s11] sm:$0xff]
        %v1526 = vld [vmem:[%s11 + $0x8] sm:$0xff]
        %1528 = vset.pattern.permute.xlu0 0
        %1529 = vperm.xlu0 %1528, %v1525
        %v1530 = vpop.permute.xlu0 %1529
        %1533 = vset.pattern.permute.xlu0 0
        %1534 = vperm.xlu0 %1533, %v1526
        %v1535 = vpop.permute.xlu0 %1534
        %v1538 = vsel %vm756, %v1270, 0
        %v1541 = vsel %vm756, %v1272, 0
        %1543 = vmatprep.subr.mxu0 %v1298
        %1544 = vmatpush1.msra.mxu0 %v1297
        %1545 = vmatprep.subr.mxu0 %v1300
        %1546 = vmatpush1.msra.mxu0 %v1299
        %1547 = vmatprep.subr.mxu0 %v1348
        %1548 = vmatpush1.msra.mxu0 %v1347
        %1549 = vmatprep.subr.mxu0 %v1350
        %1550 = vmatpush1.msra.mxu0 %v1349
        %1551 = vmatprep.subr.mxu0 %v1374
        %1552 = vmatpush1.msra.mxu0 %v1373
        %1553 = vmatprep.subr.mxu0 %v1376
        %1554 = vmatpush1.msra.mxu0 %v1375
        %1555 = vmatprep.subr.mxu0 %v1400
        %1556 = vmatpush1.msra.mxu0 %v1399
        %1557 = vmatprep.subr.mxu0 %v1402
        %1558 = vmatpush1.msra.mxu0 %v1401
        %1559 = vmatprep.subr.mxu0 %v1420
        %1560 = vmatpush1.msra.mxu0 %v1419
        %1561 = vmatprep.subr.mxu0 %v1422
        %1562 = vmatpush1.msra.mxu0 %v1421
        %1563 = vmatprep.subr.mxu0 %v1446
        %1564 = vmatpush1.msra.mxu0 %v1445
        %1565 = vmatprep.subr.mxu0 %v1448
        %1566 = vmatpush1.msra.mxu0 %v1447
        %1567 = vmatprep.subr.mxu0 %v1472
        %1568 = vmatpush1.msra.mxu0 %v1471
        %1569 = vmatprep.subr.mxu0 %v1474
        %1570 = vmatpush1.msra.mxu0 %v1473
        %1571 = vmatprep.subr.mxu0 %v1492
        %1572 = vmatpush1.msra.mxu0 %v1491
        %1573 = vmatprep.subr.mxu0 %v1494
        %1574 = vmatpush1.msra.mxu0 %v1493
        %1575 = vmatprep.subr.mxu0 %v1518
        %1576 = vmatpush1.msra.mxu0 %v1517
        %1577 = vmatprep.subr.mxu0 %v1520
        %1578 = vmatpush1.msra.mxu0 %v1519
        %1579 = vmatprep.subr.mxu0 0.0
        %1580 = vmatpush1.msra.mxu0 0.0
        %1581 = vmatprep.subr.mxu0 0.0
        %1582 = vmatpush1.msra.mxu0 0.0
        %1583 = vmatprep.subr.mxu0 0.0
        %1584 = vmatpush1.msra.mxu0 0.0
        %1585 = vmatprep.subr.mxu0 0.0
        %1586 = vmatpush1.msra.mxu0 0.0
        %1587 = vmatprep.subr.mxu0 0.0
        %1588 = vmatpush1.msra.mxu0 0.0
        %1589 = vmatprep.subr.mxu0 0.0
        %1590 = vmatpush1.msra.mxu0 0.0
        %1591 = vmatprep.subr.mxu0 0.0
        %1592 = vmatpush1.msra.mxu0 0.0
        %1593 = vmatprep.subr.mxu0 0.0
        %1594 = vmatpush1.msra.mxu0 0.0
        %1595 = vmatprep.subr.mxu0 0.0
        %1596 = vmatpush1.msra.mxu0 0.0
        %1597 = vmatprep.subr.mxu0 0.0
        %1598 = vmatpush1.msra.mxu0 0.0
        %1599 = vmatprep.subr.mxu0 0.0
        %1600 = vmatpush1.msra.mxu0 0.0
        %1601 = vmatprep.subr.mxu0 0.0
        %1602 = vmatpush1.msra.mxu0 0.0
        %1603 = vmatprep.subr.mxu0 0.0
        %1604 = vmatpush1.msra.mxu0 0.0
        %1605 = vmatprep.subr.mxu0 0.0
        %1606 = vmatpush1.msra.mxu0 0.0
        %1607 = vmatprep.mubr.f32.mxu0 %v1538
        %1608 = vmatmul.mubr.f32.gmra.mrb[0].mxu0 %v1269
        %v1609 = vpop.f32.mrb[0].mxu0
        %v1610 = vadd.f32 %v1530, %v1609
        %v1611 = vpop.f32.mrb[0].mxu0
        %v1612 = vadd.f32 %v1530, %v1611
        %1613 = vmatprep.mubr.f32.mxu0 %v1541
        %1614 = vmatmul.mubr.f32.gmra.mrb[0].mxu0 %v1271
        %v1615 = vpop.f32.mrb[0].mxu0
        %v1616 = vadd.f32 %v1535, %v1615
        %v1617 = vpop.f32.mrb[0].mxu0
        %v1618 = vadd.f32 %v1535, %v1617
        %1619 = vdwg.mxu0
        %v1620 = vld [vmem:[%s12] sm:$0xff]
        %v1621 = vld [vmem:[%s12 + $0x8] sm:$0xff]
        %v1623 = vsel %vm494, %v1620, 0
        %v1626 = vsel %vm494, %v1621, 0
        %1628 = vmatprep.subr.mxu0 %v487
        %1629 = vmatpush1.msra.mxu0 %v486
        %1630 = vmatprep.subr.mxu0 0.0
        %1631 = vmatpush1.msra.mxu0 0.0
        %1632 = vmatprep.subr.mxu0 0.0
        %1633 = vmatpush1.msra.mxu0 0.0
        %1634 = vmatprep.subr.mxu0 0.0
        %1635 = vmatpush1.msra.mxu0 0.0
        %1636 = vmatprep.subr.mxu0 0.0
        %1637 = vmatpush1.msra.mxu0 0.0
        %1638 = vmatprep.subr.mxu0 0.0
        %1639 = vmatpush1.msra.mxu0 0.0
        %1640 = vmatprep.subr.mxu0 0.0
        %1641 = vmatpush1.msra.mxu0 0.0
        %1642 = vmatprep.subr.mxu0 0.0
        %1643 = vmatpush1.msra.mxu0 0.0
        %1644 = vmatprep.subr.mxu0 0.0
        %1645 = vmatpush1.msra.mxu0 0.0
        %1646 = vmatprep.subr.mxu0 0.0
        %1647 = vmatpush1.msra.mxu0 0.0
        %1648 = vmatprep.subr.mxu0 0.0
        %1649 = vmatpush1.msra.mxu0 0.0
        %1650 = vmatprep.subr.mxu0 0.0
        %1651 = vmatpush1.msra.mxu0 0.0
        %1652 = vmatprep.subr.mxu0 0.0
        %1653 = vmatpush1.msra.mxu0 0.0
        %1654 = vmatprep.subr.mxu0 0.0
        %1655 = vmatpush1.msra.mxu0 0.0
        %1656 = vmatprep.subr.mxu0 0.0
        %1657 = vmatpush1.msra.mxu0 0.0
        %1658 = vmatprep.subr.mxu0 0.0
        %1659 = vmatpush1.msra.mxu0 0.0
        %1660 = vmatprep.subr.mxu0 0.0
        %1661 = vmatpush1.msra.mxu0 0.0
        %1662 = vmatprep.subr.mxu0 0.0
        %1663 = vmatpush1.msra.mxu0 0.0
        %1664 = vmatprep.subr.mxu0 0.0
        %1665 = vmatpush1.msra.mxu0 0.0
        %1666 = vmatprep.subr.mxu0 0.0
        %1667 = vmatpush1.msra.mxu0 0.0
        %1668 = vmatprep.subr.mxu0 0.0
        %1669 = vmatpush1.msra.mxu0 0.0
        %1670 = vmatprep.subr.mxu0 0.0
        %1671 = vmatpush1.msra.mxu0 0.0
        %1672 = vmatprep.subr.mxu0 0.0
        %1673 = vmatpush1.msra.mxu0 0.0
        %1674 = vmatprep.subr.mxu0 0.0
        %1675 = vmatpush1.msra.mxu0 0.0
        %1676 = vmatprep.subr.mxu0 0.0
        %1677 = vmatpush1.msra.mxu0 0.0
        %1678 = vmatprep.subr.mxu0 0.0
        %1679 = vmatpush1.msra.mxu0 0.0
        %1680 = vmatprep.subr.mxu0 0.0
        %1681 = vmatpush1.msra.mxu0 0.0
        %1682 = vmatprep.subr.mxu0 0.0
        %1683 = vmatpush1.msra.mxu0 0.0
        %1684 = vmatprep.subr.mxu0 0.0
        %1685 = vmatpush1.msra.mxu0 0.0
        %1686 = vmatprep.subr.mxu0 0.0
        %1687 = vmatpush1.msra.mxu0 0.0
        %1688 = vmatprep.subr.mxu0 0.0
        %1689 = vmatpush1.msra.mxu0 0.0
        %1690 = vmatprep.subr.mxu0 0.0
        %1691 = vmatpush1.msra.mxu0 0.0
        %1692 = vmatprep.mubr.f32.mxu0 0.0
        %1693 = vmatmul.mubr.f32.gmra.mrb[0].mxu0 %v1623
        %v1694 = vpop.f32.mrb[0].mxu0
        %v1695 = vadd.f32 0.0, %v1694
        %v1696 = vpop.f32.mrb[0].mxu0
        %v1697 = vadd.f32 0.0, %v1696
        %1698 = vmatprep.mubr.f32.mxu0 0.0
        %1699 = vmatmul.mubr.f32.gmra.mrb[0].mxu0 %v1626
        %v1700 = vpop.f32.mrb[0].mxu0
        %v1701 = vadd.f32 0.0, %v1700
        %v1702 = vpop.f32.mrb[0].mxu0
        %v1703 = vadd.f32 0.0, %v1702
        %1704 = vdwg.mxu0
        %v1705 = vadd.f32 %v1610, %v1695
        %v1706 = vadd.f32 %v1612, %v1697
        %v1707 = vadd.f32 %v1616, %v1701
        %v1708 = vadd.f32 %v1618, %v1703
        %v1709 = vld [vmem:[%s13] sm:$0xff]
        %v1710 = vld [vmem:[%s13 + $0x8] sm:$0xff]
        %1712 = vset.pattern.permute.xlu0 0
        %1713 = vperm.xlu0 %1712, %v1709
        %v1714 = vpop.permute.xlu0 %1713
        %1717 = vset.pattern.permute.xlu0 0
        %1718 = vperm.xlu0 %1717, %v1710
        %v1719 = vpop.permute.xlu0 %1718
        %v1721 = vadd.f32 %v1705, %v1714
        %v1722 = vadd.f32 %v1706, %v1714
        %v1723 = vadd.f32 %v1707, %v1719
        %v1724 = vadd.f32 %v1708, %v1719
        %1725 = vst [vmem:[%s475] sm:$0xff] %v1721
        %1726 = vst [vmem:[%s475 + $0x8] sm:$0xff] %v1722
        %1727 = vst [vmem:[%s475 + $0x10] sm:$0xff] %v1723
        %1728 = vst [vmem:[%s475 + $0x18] sm:$0xff] %v1724
        %s1729 = sand.u32 %s340, 1
        %s1730 = scalar_lea.sflag [#allocation3], %s1729
        %s1731 = sand.u32 %s340, 1
        %s1732 = smul.addr %s1731, 32
        %s1733 = scalar_lea.vmem [#allocation2], %s1732
        // Predicated region
        $region77: #{tpu_custom_call.1} parent=75 // pred_check
          %p1734 = pneg %p350
        $region78: #{tpu_custom_call.1} parent=75 // pred_check_branch
          %1736 = sbr.rel (%p1734) target = $region80
        $region79: #{tpu_custom_call.1} parent=75 // pred_region
          %s1738 = ssub.s32 512, 512
          %1739 = vsyncadd %s1730, %s1738
          %s1740 = smul.addr %s28, 4
          %s1741 = smul.addr %s1740, 128
          %s1742 = scalar_lea.hbm %s14, %s1741
          %s1743 = sshll.u32 %s1733, 4
          %s1744 = int_to_ptr.vmem [resolvable:$true] %s1743
          %1749 = dma.vmem_to_hbm [thread:$0]  %s1744, 512, %s1742, %s1730, 256, 256, 16
        $region80: #{tpu_custom_call.1} parent=75 // pred_fallthru
          _
      $region76: #{tpu_custom_call.1} parent=5 // pred_fallthru
        _
      %p1750 = scmp.le.s32.totalorder 2, %s23
      // Predicated region
      $region81: #{tpu_custom_call.1} parent=5 // pred_check
        %p1751 = pneg %p1750
      $region82: #{tpu_custom_call.1} parent=5 // pred_check_branch
        %1753 = sbr.rel (%p1751) target = $region84
      $region83: #{tpu_custom_call.1} parent=5 // pred_region
        %s1754 = ssub.s32 %s23, 2
        // Predicated region
        $region85: #{tpu_custom_call.1} parent=83 // pred_check
          %p1755 = pneg %p356
        $region86: #{tpu_custom_call.1} parent=83 // pred_check_branch
          %1757 = sbr.rel (%p1755) target = $region88
        $region87: #{tpu_custom_call.1} parent=83 // pred_region
          %s1758 = sand.u32 %s341, 1
          %s1759 = scalar_lea.sflag [#allocation3], %s1758
          %s1760 = sand.u32 %s341, 1
          %s1761 = smul.addr %s1760, 32
          %s1762 = scalar_lea.vmem [#allocation2], %s1761
          %1763 = dma.done %s1759, 512
        $region88: #{tpu_custom_call.1} parent=83 // pred_fallthru
          _
      $region84: #{tpu_custom_call.1} parent=5 // pred_fallthru
        _
    $region6: #{tpu_custom_call.1} parent=1 // loop_footer
      %s27 = sadd.s32 1, %s23
    $region7: #{tpu_custom_call.1} parent=1 // loop_footer_branch
      %22 = sbr.rel target = $region3
    $region8: #{tpu_custom_call.1} parent=1 // loop_exit
      _
    %1764 = vsyncpa [#allocation3], 1
    %s1765 = scalar_lea.sflag [#allocation3], 1
    %1766 = vsyncpa %s1765, 1

</llo_original>
